<compile_context>
chip_gen: v5e
topology: v5e:2x2
jax: 0.10.0
libtpu: 0.0.40
codegen_flags: <defaults>
</compile_context>

<pallas_src>
import jax
import jax.numpy as jnp
from jax.experimental import pallas as pl
from jax.experimental.pallas import tpu as pltpu

IN_FEATURES = 784
HIDDEN = 200
HIDDEN_PAD = 256      # 200 -> 256: exact MXU tile, no masked lanes
OUT = 10
OUT_PAD = 128         # lane-dense output block, avoids masked partial stores


def _mlp_kernel(x_ref, w1_ref, b1_ref, w2_ref, b2_ref, w3_ref, b3_ref, out_ref):
    # In-kernel f32 -> bf16 cast of the streamed activations (free VPU work under
    # the HBM/DMA roofline); all matmuls accumulate in f32 on the MXU.
    x = x_ref[...].astype(jnp.bfloat16)
    # fc1 + relu
    h1 = jnp.dot(x, w1_ref[...], preferred_element_type=jnp.float32)
    h1 = jnp.maximum(h1 + b1_ref[...], 0.0).astype(jnp.bfloat16)
    # fc2 + relu
    h2 = jnp.dot(h1, w2_ref[...], preferred_element_type=jnp.float32)
    h2 = jnp.maximum(h2 + b2_ref[...], 0.0).astype(jnp.bfloat16)
    # fc3 (no activation), bf16 lane-dense store
    y = jnp.dot(h2, w3_ref[...], preferred_element_type=jnp.float32)
    out_ref[...] = (y + b3_ref[...]).astype(out_ref.dtype)


def _pad2(a, shape, dtype):
    """Zero-pad a 2-D array into `shape` and cast to `dtype`."""
    return jnp.zeros(shape, dtype).at[: a.shape[0], : a.shape[1]].set(a.astype(dtype))


def prepare_params(w1, b1, w2, b2, w3, b3):
    """One-time prep: zero-pad to MXU-friendly widths, cast weights to bf16.

    Serving callers should call this once and reuse the result across forward calls
    so the 0.6 MiB weight set is not re-padded/re-cast every invocation.
    """
    return (
        _pad2(w1, (IN_FEATURES, HIDDEN_PAD), jnp.bfloat16),
        _pad2(b1, (1, HIDDEN_PAD), jnp.float32),
        _pad2(w2, (HIDDEN_PAD, HIDDEN_PAD), jnp.bfloat16),
        _pad2(b2, (1, HIDDEN_PAD), jnp.float32),
        _pad2(w3, (HIDDEN_PAD, OUT_PAD), jnp.bfloat16),
        _pad2(b3, (1, OUT_PAD), jnp.float32),
    )


def mnist_2nn_forward_prepared(x, w1p, b1p, w2p, b2p, w3p, b3p, *,
                               block_b=1024, core_parallel=False):
    """x: (B, 784) f32. Prepared (padded/bf16) params from prepare_params().
    Returns bf16 logits of shape (B, 10)."""
    B = x.shape[0]
    x = x.astype(jnp.float32)

    # Batch tile: multiple of 8 sublanes; default 1024 amortizes per-step overhead.
    tm = min(block_b, B)
    tm = max(8, -(-tm // 8) * 8)
    b_pad = -(-B // tm) * tm
    if b_pad != B:
        # Only hit when B is not a multiple of tm. Padded rows are row-local garbage
        # that lands in discarded output rows only.
        x = jnp.pad(x, ((0, b_pad - B), (0, 0)))

    const = lambda i: (0, 0)   # weights/biases: same block every step -> DMA'd once, resident
    sem = (pltpu.CORE_PARALLEL,) if core_parallel else ("parallel",)

    out = pl.pallas_call(
        _mlp_kernel,
        out_shape=jax.ShapeDtypeStruct((b_pad, OUT_PAD), jnp.bfloat16),
        grid_spec=pltpu.PrefetchScalarGridSpec(
            num_scalar_prefetch=0,
            grid=(b_pad // tm,),
            in_specs=[
                pl.BlockSpec((tm, IN_FEATURES), lambda i: (i, 0)),   # x: streamed/pipelined, f32
                pl.BlockSpec((IN_FEATURES, HIDDEN_PAD), const),      # w1 resident (bf16)
                pl.BlockSpec((1, HIDDEN_PAD), const),                # b1
                pl.BlockSpec((HIDDEN_PAD, HIDDEN_PAD), const),       # w2
                pl.BlockSpec((1, HIDDEN_PAD), const),                # b2
                pl.BlockSpec((HIDDEN_PAD, OUT_PAD), const),          # w3
                pl.BlockSpec((1, OUT_PAD), const),                   # b3
            ],
            out_specs=pl.BlockSpec((tm, OUT_PAD), lambda i: (i, 0)),
        ),
        compiler_params=pltpu.CompilerParams(
            dimension_semantics=sem,
            vmem_limit_bytes=32 * 1024 * 1024,
        ),
    )(x, w1p, b1p, w2p, b2p, w3p, b3p)
    # Strip batch padding and the 118 zero output columns (bf16 slice, cheap).
    return out[:B, :OUT]


def mnist_2nn_forward(x, w1, b1, w2, b2, w3, b3, *, block_b=1024, core_parallel=False):
    """Convenience wrapper; prefer prepare_params() + mnist_2nn_forward_prepared()
    when calling repeatedly with the same weights."""
    params = prepare_params(w1, b1, w2, b2, w3, b3)
    return mnist_2nn_forward_prepared(x, *params, block_b=block_b,
                                      core_parallel=core_parallel)


def init_params(key):
    """Deterministic PyTorch-Linear-style init: U(-1/sqrt(fan_in), 1/sqrt(fan_in))."""
    dims = [(IN_FEATURES, HIDDEN), (HIDDEN, HIDDEN), (HIDDEN, OUT)]
    params = []
    for fan_in, fan_out in dims:
        kw, kb, key = jax.random.split(key, 3)
        bound = 1.0 / (fan_in ** 0.5)
        w = jax.random.uniform(kw, (fan_in, fan_out), jnp.float32, -bound, bound)
        b = jax.random.uniform(kb, (1, fan_out), jnp.float32, -bound, bound)
        params += [w, b]
    return params


if __name__ == "__main__":
    key = jax.random.PRNGKey(0)
    kx, kp = jax.random.split(key)
    B = 32
    x = jax.random.normal(kx, (B, IN_FEATURES), jnp.float32)
    w1, b1, w2, b2, w3, b3 = init_params(kp)

    # Small batch tile so the grid / pipelining path is actually exercised (2 steps).
    # Production callers should use the default block_b=1024.
    out = mnist_2nn_forward(x, w1, b1, w2, b2, w3, b3, block_b=16)
    out = jax.block_until_ready(out)

    # Reference in plain JAX with the identical bf16 dataflow (f32 accumulation,
    # bf16 logits), matching the kernel's intentional precision trade-off.
    def ref_fwd(xf):
        xb = xf.astype(jnp.bfloat16)
        h1 = jnp.maximum(jnp.dot(xb, w1.astype(jnp.bfloat16),
                                 preferred_element_type=jnp.float32) + b1, 0.0)
        h1 = h1.astype(jnp.bfloat16)
        h2 = jnp.maximum(jnp.dot(h1, w2.astype(jnp.bfloat16),
                                 preferred_element_type=jnp.float32) + b2, 0.0)
        h2 = h2.astype(jnp.bfloat16)
        y = jnp.dot(h2, w3.astype(jnp.bfloat16),
                    preferred_element_type=jnp.float32) + b3
        return y.astype(jnp.bfloat16)

    ref = ref_fwd(x)
    assert out.shape == (B, OUT)
    assert out.dtype == jnp.bfloat16
    err = float(jnp.max(jnp.abs(out.astype(jnp.float32) - ref.astype(jnp.float32))))
    assert err < 2e-2, err
    print("KERNEL_OK")
</pallas_src>

<mosaic_0001>
module attributes {stable_mosaic.version = 11 : i64} {
  func.func @_mlp_kernel(%arg0: i32, %arg1: memref<16x784xf32, #tpu.memory_space<vmem>>, %arg2: memref<784x256xbf16, #tpu.memory_space<vmem>>, %arg3: memref<1x256xf32, #tpu.memory_space<vmem>>, %arg4: memref<256x256xbf16, #tpu.memory_space<vmem>>, %arg5: memref<1x256xf32, #tpu.memory_space<vmem>>, %arg6: memref<256x128xbf16, #tpu.memory_space<vmem>>, %arg7: memref<1x128xf32, #tpu.memory_space<vmem>>, %arg8: memref<16x128xbf16, #tpu.memory_space<vmem>>) attributes {dimension_semantics = [#tpu.dimension_semantics<parallel>], iteration_bounds = array<i64: 2>, scalar_prefetch = 0 : i64, scratch_operands = 0 : i64, tpu.core_type = #tpu.core_type<tc>, window_params = [{transform_indices = @transform_0, window_bounds = array<i64: 16, 784>}, {pipeline_mode = #tpu.pipeline_mode<synchronous>, transform_indices = @transform_1, window_bounds = array<i64: 784, 256>}, {pipeline_mode = #tpu.pipeline_mode<synchronous>, transform_indices = @transform_2, window_bounds = array<i64: 1, 256>}, {pipeline_mode = #tpu.pipeline_mode<synchronous>, transform_indices = @transform_3, window_bounds = array<i64: 256, 256>}, {pipeline_mode = #tpu.pipeline_mode<synchronous>, transform_indices = @transform_4, window_bounds = array<i64: 1, 256>}, {pipeline_mode = #tpu.pipeline_mode<synchronous>, transform_indices = @transform_5, window_bounds = array<i64: 256, 128>}, {pipeline_mode = #tpu.pipeline_mode<synchronous>, transform_indices = @transform_6, window_bounds = array<i64: 1, 128>}, {transform_indices = @transform_7, window_bounds = array<i64: 16, 128>}]} {
    %c0 = arith.constant 0 : index
    %c0_0 = arith.constant 0 : index
    %0 = vector.load %arg1[%c0, %c0_0] : memref<16x784xf32, #tpu.memory_space<vmem>>, vector<16x784xf32>
    %1 = arith.truncf %0 : vector<16x784xf32> to vector<16x784xbf16>
    %c0_1 = arith.constant 0 : index
    %c0_2 = arith.constant 0 : index
    %2 = vector.load %arg2[%c0_1, %c0_2] : memref<784x256xbf16, #tpu.memory_space<vmem>>, vector<784x256xbf16>
    %cst = arith.constant dense<0.000000e+00> : vector<16x256xf32>
    %3 = tpu.matmul %1, %2, %cst {dimension_numbers = #tpu.dot_dimension_numbers<[1], [0], [0], [1], [0, 0, 1, 1], [], []>} : vector<16x784xbf16>, vector<784x256xbf16>, vector<16x256xf32> -> vector<16x256xf32>
    %c0_3 = arith.constant 0 : index
    %c0_4 = arith.constant 0 : index
    %4 = vector.load %arg3[%c0_3, %c0_4] : memref<1x256xf32, #tpu.memory_space<vmem>>, vector<1x256xf32>
    %5 = vector.broadcast %4 : vector<1x256xf32> to vector<16x256xf32>
    %6 = arith.addf %3, %5 : vector<16x256xf32>
    %cst_5 = arith.constant 0.000000e+00 : f32
    %7 = vector.broadcast %cst_5 : f32 to vector<16x256xf32>
    %8 = arith.maximumf %6, %7 : vector<16x256xf32>
    %9 = arith.truncf %8 : vector<16x256xf32> to vector<16x256xbf16>
    %c0_6 = arith.constant 0 : index
    %c0_7 = arith.constant 0 : index
    %10 = vector.load %arg4[%c0_6, %c0_7] : memref<256x256xbf16, #tpu.memory_space<vmem>>, vector<256x256xbf16>
    %cst_8 = arith.constant dense<0.000000e+00> : vector<16x256xf32>
    %11 = tpu.matmul %9, %10, %cst_8 {dimension_numbers = #tpu.dot_dimension_numbers<[1], [0], [0], [1], [0, 0, 1, 1], [], []>} : vector<16x256xbf16>, vector<256x256xbf16>, vector<16x256xf32> -> vector<16x256xf32>
    %c0_9 = arith.constant 0 : index
    %c0_10 = arith.constant 0 : index
    %12 = vector.load %arg5[%c0_9, %c0_10] : memref<1x256xf32, #tpu.memory_space<vmem>>, vector<1x256xf32>
    %13 = vector.broadcast %12 : vector<1x256xf32> to vector<16x256xf32>
    %14 = arith.addf %11, %13 : vector<16x256xf32>
    %cst_11 = arith.constant 0.000000e+00 : f32
    %15 = vector.broadcast %cst_11 : f32 to vector<16x256xf32>
    %16 = arith.maximumf %14, %15 : vector<16x256xf32>
    %17 = arith.truncf %16 : vector<16x256xf32> to vector<16x256xbf16>
    %c0_12 = arith.constant 0 : index
    %c0_13 = arith.constant 0 : index
    %18 = vector.load %arg6[%c0_12, %c0_13] : memref<256x128xbf16, #tpu.memory_space<vmem>>, vector<256x128xbf16>
    %cst_14 = arith.constant dense<0.000000e+00> : vector<16x128xf32>
    %19 = tpu.matmul %17, %18, %cst_14 {dimension_numbers = #tpu.dot_dimension_numbers<[1], [0], [0], [1], [0, 0, 1, 1], [], []>} : vector<16x256xbf16>, vector<256x128xbf16>, vector<16x128xf32> -> vector<16x128xf32>
    %c0_15 = arith.constant 0 : index
    %c0_16 = arith.constant 0 : index
    %20 = vector.load %arg7[%c0_15, %c0_16] : memref<1x128xf32, #tpu.memory_space<vmem>>, vector<1x128xf32>
    %21 = vector.broadcast %20 : vector<1x128xf32> to vector<16x128xf32>
    %22 = arith.addf %19, %21 : vector<16x128xf32>
    %23 = arith.truncf %22 : vector<16x128xf32> to vector<16x128xbf16>
    %c0_17 = arith.constant 0 : index
    %c0_18 = arith.constant 0 : index
    %24 = vector.load %arg8[%c0_17, %c0_18] : memref<16x128xbf16, #tpu.memory_space<vmem>>, vector<16x128xbf16>
    tpu.vector_store %arg8[%c0_17, %c0_18], %23 {strides = array<i32>} : memref<16x128xbf16, #tpu.memory_space<vmem>>, vector<16x128xbf16>,
    return
  }
  func.func @transform_0(%arg0: i32) -> (i32, i32) {
    %c0_i32 = arith.constant 0 : i32
    %c0_i32_0 = arith.constant 0 : i32
    return %arg0, %c0_i32 : i32, i32
  }
  func.func @transform_1(%arg0: i32) -> (i32, i32) {
    %c0_i32 = arith.constant 0 : i32
    %c0_i32_0 = arith.constant 0 : i32
    %c0_i32_1 = arith.constant 0 : i32
    return %c0_i32, %c0_i32_0 : i32, i32
  }
  func.func @transform_2(%arg0: i32) -> (i32, i32) {
    %c0_i32 = arith.constant 0 : i32
    %c0_i32_0 = arith.constant 0 : i32
    %c0_i32_1 = arith.constant 0 : i32
    return %c0_i32, %c0_i32_0 : i32, i32
  }
  func.func @transform_3(%arg0: i32) -> (i32, i32) {
    %c0_i32 = arith.constant 0 : i32
    %c0_i32_0 = arith.constant 0 : i32
    %c0_i32_1 = arith.constant 0 : i32
    return %c0_i32, %c0_i32_0 : i32, i32
  }
  func.func @transform_4(%arg0: i32) -> (i32, i32) {
    %c0_i32 = arith.constant 0 : i32
    %c0_i32_0 = arith.constant 0 : i32
    %c0_i32_1 = arith.constant 0 : i32
    return %c0_i32, %c0_i32_0 : i32, i32
  }
  func.func @transform_5(%arg0: i32) -> (i32, i32) {
    %c0_i32 = arith.constant 0 : i32
    %c0_i32_0 = arith.constant 0 : i32
    %c0_i32_1 = arith.constant 0 : i32
    return %c0_i32, %c0_i32_0 : i32, i32
  }
  func.func @transform_6(%arg0: i32) -> (i32, i32) {
    %c0_i32 = arith.constant 0 : i32
    %c0_i32_0 = arith.constant 0 : i32
    %c0_i32_1 = arith.constant 0 : i32
    return %c0_i32, %c0_i32_0 : i32, i32
  }
  func.func @transform_7(%arg0: i32) -> (i32, i32) {
    %c0_i32 = arith.constant 0 : i32
    %c0_i32_0 = arith.constant 0 : i32
    return %arg0, %c0_i32 : i32, i32
  }
}

</mosaic_0001>

<llo_original>
// kernel: tpu_custom_call.1
$region0: #{tpu_custom_call.1}
  #allocation0 [shape = 'u32[]', space=smem, size = 0x4, offset = 0x4, fixed_abs, tag = 'smem constant byte address 0x4 - core index']
  #allocation1 [shape = 'u32[72,128]{1,0:T(1,128)}', space=vmem, size = 0x9000, scoped, tag = 'internal scratch']
  %s0 = inlined_call_operand.hbm [shape: f32[32,784], index: 0, kind: input, shape index: {}]
  %s1 = inlined_call_operand.hbm [shape: bf16[784,256], index: 1, kind: input, shape index: {}]
  %s2 = inlined_call_operand.hbm [shape: f32[1,256], index: 2, kind: input, shape index: {}]
  %s3 = inlined_call_operand.hbm [shape: bf16[256,256], index: 3, kind: input, shape index: {}]
  %s4 = inlined_call_operand.vmem [shape: f32[1,256], index: 4, kind: input, shape index: {}]
  %s5 = inlined_call_operand.hbm [shape: bf16[256,128], index: 5, kind: input, shape index: {}]
  %s6 = inlined_call_operand.vmem [shape: f32[1,128], index: 6, kind: input, shape index: {}]
  %s7 = inlined_call_operand.hbm [shape: bf16[32,128], index: 7, kind: output, shape index: {}]
  %s8 = sld [smem:[#allocation0]]
  $region81: #{tpu_custom_call.1} parent=0
    _
  %s10 = ssub.s32 1, %s8
  %s11 = scalar_select 0, %s10, %s8
  $region1: #{tpu_custom_call.1} parent=0
    #allocation2 [shape = 'u8[114688]{0}', space=vmem, size = 0x1c000, scoped, tag = 'input window, operand 0']
    #allocation3 [shape = 's32[2]{0}', space=sflag, size = 0x8, scoped, tag = 'scoped memory for tpu_custom_call.1']
    #allocation4 [shape = 's32[2]{0}', space=sflag, size = 0x8, scoped, tag = 'scoped memory for tpu_custom_call.1']
    #allocation5 [shape = 'u8[401408]{0}', space=vmem, size = 0x62000, scoped, tag = 'input window, operand 1, single buffered']
    #allocation6 [shape = 's32[1]{0}', space=sflag, size = 0x4, scoped, tag = 'scoped memory for tpu_custom_call.1']
    #allocation7 [shape = 'u8[1024]{0}', space=vmem, size = 0x400, scoped, tag = 'input window, operand 2, single buffered']
    #allocation8 [shape = 'u8[131072]{0}', space=vmem, size = 0x20000, scoped, tag = 'input window, operand 3, single buffered']
    #allocation9 [shape = 's32[1]{0}', space=sflag, size = 0x4, scoped, tag = 'scoped memory for tpu_custom_call.1']
    #allocation10 [shape = 'u8[65536]{0}', space=vmem, size = 0x10000, scoped, tag = 'input window, operand 5, single buffered']
    #allocation11 [shape = 'u8[8192]{0}', space=vmem, size = 0x2000, scoped, tag = 'output window, operand 0']
    %12 = vsyncpa [#allocation3], 0
    %s13 = scalar_lea.sflag [#allocation3], 1
    %14 = vsyncpa %s13, 0
    %15 = vsyncpa [#allocation6], 0
    %16 = vsyncpa [#allocation9], 0
    %17 = vsyncpa [#allocation4], 0
    %s18 = scalar_lea.sflag [#allocation4], 1
    %19 = vsyncpa %s18, 0
    loop: start=0, step=1, limit=4
    $region2: #{tpu_custom_call.1} parent=1 // loop_pre_header
      _
    $region3: #{tpu_custom_call.1} parent=1 // loop_header
      %s21 = sphi 0, %s25
      %p22 = scmp.ge.s32.totalorder %s21, 4
      %s31 = sphi 0, %s33
      %s34 = sphi 0, %s31
      %s35 = sphi 0, %s34
      %s51 = sphi 0, %s35
      %s55 = sphi 0, %s55
      %s57 = sphi 0, %s55
      %s58 = sphi 0, %s57
      %s72 = sphi 0, %s58
      %s76 = sphi 0, %s76
      %s78 = sphi 0, %s76
      %s79 = sphi 0, %s78
      %s93 = sphi 0, %s79
      %s97 = sphi 0, %s97
      %s99 = sphi 0, %s97
      %s100 = sphi 0, %s99
      %s114 = sphi 0, %s100
      %s118 = sphi 0, %s118
      %s120 = sphi 0, %s118
      %s121 = sphi 0, %s120
      %s135 = sphi 0, %s121
      %s139 = sphi 0, %s139
      %s141 = sphi 0, %s139
      %s142 = sphi 0, %s141
      %s156 = sphi 0, %s142
      %s160 = sphi 0, %s160
      %s162 = sphi 0, %s160
      %s163 = sphi 0, %s162
      %s177 = sphi 0, %s163
      %s183 = sphi 0, %s185
      %s186 = sphi 0, %s183
      %s187 = sphi 0, %s186
      %s203 = sphi 0, %s187
    $region4: #{tpu_custom_call.1} parent=1 // loop_header_branch
      %24 = sbr.rel (%p22) target = $region8
    $region5: #{tpu_custom_call.1} parent=1 // loop_body
      %s26 = ssub.s32 %s21, 1
      %s27 = ssub.s32 %s21, 2
      %s28 = sadd.s32 %s21, 1
      %s29 = ssub.s32 %s21, %s28
      %p30 = scmp.eq.s32.totalorder %s29, 0
      %s32 = sadd.s32 %s31, 1
      %s33 = scalar_select %p30, %s31, %s32
      %p36 = pneg %p30
      %p37 = scmp.eq.s32.totalorder %s21, 1
      %p38 = por %p36, %p37
      %p39 = scmp.ne.s32.totalorder %s31, %s34
      %p40 = scmp.eq.s32.totalorder %s21, 0
      %p41 = por %p39, %p40
      %p42 = scmp.ne.s32.totalorder %s31, %s34
      %p43 = scmp.eq.s32.totalorder %s26, 1
      %p44 = por %p42, %p43
      %p45 = scmp.ne.s32.totalorder %s34, %s35
      %p46 = scmp.eq.s32.totalorder %s26, 0
      %p47 = por %p45, %p46
      %p48 = scmp.ne.s32.totalorder %s34, %s35
      %p49 = scmp.eq.s32.totalorder %s27, 1
      %p50 = por %p48, %p49
      %p52 = scmp.ne.s32.totalorder %s35, %s51
      %p53 = scmp.eq.s32.totalorder %s27, 0
      %p54 = por %p52, %p53
      %s56 = sadd.s32 %s55, 1
      %p59 = scmp.eq.s32.totalorder %s21, 1
      %p60 = scmp.ne.s32.totalorder %s55, %s57
      %p61 = scmp.eq.s32.totalorder %s21, 0
      %p62 = por %p60, %p61
      %p63 = scmp.ne.s32.totalorder %s55, %s57
      %p64 = scmp.eq.s32.totalorder %s26, 1
      %p65 = por %p63, %p64
      %p66 = scmp.ne.s32.totalorder %s57, %s58
      %p67 = scmp.eq.s32.totalorder %s26, 0
      %p68 = por %p66, %p67
      %p69 = scmp.ne.s32.totalorder %s57, %s58
      %p70 = scmp.eq.s32.totalorder %s27, 1
      %p71 = por %p69, %p70
      %p73 = scmp.ne.s32.totalorder %s58, %s72
      %p74 = scmp.eq.s32.totalorder %s27, 0
      %p75 = por %p73, %p74
      %s77 = sadd.s32 %s76, 1
      %p80 = scmp.eq.s32.totalorder %s21, 1
      %p81 = scmp.ne.s32.totalorder %s76, %s78
      %p82 = scmp.eq.s32.totalorder %s21, 0
      %p83 = por %p81, %p82
      %p84 = scmp.ne.s32.totalorder %s76, %s78
      %p85 = scmp.eq.s32.totalorder %s26, 1
      %p86 = por %p84, %p85
      %p87 = scmp.ne.s32.totalorder %s78, %s79
      %p88 = scmp.eq.s32.totalorder %s26, 0
      %p89 = por %p87, %p88
      %p90 = scmp.ne.s32.totalorder %s78, %s79
      %p91 = scmp.eq.s32.totalorder %s27, 1
      %p92 = por %p90, %p91
      %p94 = scmp.ne.s32.totalorder %s79, %s93
      %p95 = scmp.eq.s32.totalorder %s27, 0
      %p96 = por %p94, %p95
      %s98 = sadd.s32 %s97, 1
      %p101 = scmp.eq.s32.totalorder %s21, 1
      %p102 = scmp.ne.s32.totalorder %s97, %s99
      %p103 = scmp.eq.s32.totalorder %s21, 0
      %p104 = por %p102, %p103
      %p105 = scmp.ne.s32.totalorder %s97, %s99
      %p106 = scmp.eq.s32.totalorder %s26, 1
      %p107 = por %p105, %p106
      %p108 = scmp.ne.s32.totalorder %s99, %s100
      %p109 = scmp.eq.s32.totalorder %s26, 0
      %p110 = por %p108, %p109
      %p111 = scmp.ne.s32.totalorder %s99, %s100
      %p112 = scmp.eq.s32.totalorder %s27, 1
      %p113 = por %p111, %p112
      %p115 = scmp.ne.s32.totalorder %s100, %s114
      %p116 = scmp.eq.s32.totalorder %s27, 0
      %p117 = por %p115, %p116
      %s119 = sadd.s32 %s118, 1
      %p122 = scmp.eq.s32.totalorder %s21, 1
      %p123 = scmp.ne.s32.totalorder %s118, %s120
      %p124 = scmp.eq.s32.totalorder %s21, 0
      %p125 = por %p123, %p124
      %p126 = scmp.ne.s32.totalorder %s118, %s120
      %p127 = scmp.eq.s32.totalorder %s26, 1
      %p128 = por %p126, %p127
      %p129 = scmp.ne.s32.totalorder %s120, %s121
      %p130 = scmp.eq.s32.totalorder %s26, 0
      %p131 = por %p129, %p130
      %p132 = scmp.ne.s32.totalorder %s120, %s121
      %p133 = scmp.eq.s32.totalorder %s27, 1
      %p134 = por %p132, %p133
      %p136 = scmp.ne.s32.totalorder %s121, %s135
      %p137 = scmp.eq.s32.totalorder %s27, 0
      %p138 = por %p136, %p137
      %s140 = sadd.s32 %s139, 1
      %p143 = scmp.eq.s32.totalorder %s21, 1
      %p144 = scmp.ne.s32.totalorder %s139, %s141
      %p145 = scmp.eq.s32.totalorder %s21, 0
      %p146 = por %p144, %p145
      %p147 = scmp.ne.s32.totalorder %s139, %s141
      %p148 = scmp.eq.s32.totalorder %s26, 1
      %p149 = por %p147, %p148
      %p150 = scmp.ne.s32.totalorder %s141, %s142
      %p151 = scmp.eq.s32.totalorder %s26, 0
      %p152 = por %p150, %p151
      %p153 = scmp.ne.s32.totalorder %s141, %s142
      %p154 = scmp.eq.s32.totalorder %s27, 1
      %p155 = por %p153, %p154
      %p157 = scmp.ne.s32.totalorder %s142, %s156
      %p158 = scmp.eq.s32.totalorder %s27, 0
      %p159 = por %p157, %p158
      %s161 = sadd.s32 %s160, 1
      %p164 = scmp.eq.s32.totalorder %s21, 1
      %p165 = scmp.ne.s32.totalorder %s160, %s162
      %p166 = scmp.eq.s32.totalorder %s21, 0
      %p167 = por %p165, %p166
      %p168 = scmp.ne.s32.totalorder %s160, %s162
      %p169 = scmp.eq.s32.totalorder %s26, 1
      %p170 = por %p168, %p169
      %p171 = scmp.ne.s32.totalorder %s162, %s163
      %p172 = scmp.eq.s32.totalorder %s26, 0
      %p173 = por %p171, %p172
      %p174 = scmp.ne.s32.totalorder %s162, %s163
      %p175 = scmp.eq.s32.totalorder %s27, 1
      %p176 = por %p174, %p175
      %p178 = scmp.ne.s32.totalorder %s163, %s177
      %p179 = scmp.eq.s32.totalorder %s27, 0
      %p180 = por %p178, %p179
      %s181 = ssub.s32 %s21, %s28
      %p182 = scmp.eq.s32.totalorder %s181, 0
      %s184 = sadd.s32 %s183, 1
      %s185 = scalar_select %p182, %s183, %s184
      %p188 = pneg %p182
      %p189 = scmp.eq.s32.totalorder %s21, 1
      %p190 = por %p188, %p189
      %p191 = scmp.ne.s32.totalorder %s183, %s186
      %p192 = scmp.eq.s32.totalorder %s21, 0
      %p193 = por %p191, %p192
      %p194 = scmp.ne.s32.totalorder %s183, %s186
      %p195 = scmp.eq.s32.totalorder %s26, 1
      %p196 = por %p194, %p195
      %p197 = scmp.ne.s32.totalorder %s186, %s187
      %p198 = scmp.eq.s32.totalorder %s26, 0
      %p199 = por %p197, %p198
      %p200 = scmp.ne.s32.totalorder %s186, %s187
      %p201 = scmp.eq.s32.totalorder %s27, 1
      %p202 = por %p200, %p201
      %p204 = scmp.ne.s32.totalorder %s187, %s203
      %p205 = scmp.eq.s32.totalorder %s27, 0
      %p206 = por %p204, %p205
      %p207 = scmp.le.s32.totalorder 1, %s21
      %p208 = scmp.lt.s32.totalorder %s21, 3
      %p209 = pnand %p207, %p208
      %p210 = pneg %p209
      // Predicated region
      $region9: #{tpu_custom_call.1} parent=5 // pred_check
        _
      $region10: #{tpu_custom_call.1} parent=5 // pred_check_branch
        %212 = sbr.rel (%p209) target = $region12
      $region11: #{tpu_custom_call.1} parent=5 // pred_region
        %s213 = ssub.s32 %s21, 1
        // Predicated region
        $region13: #{tpu_custom_call.1} parent=11 // pred_check
          %p214 = pneg %p68
        $region14: #{tpu_custom_call.1} parent=11 // pred_check_branch
          %216 = sbr.rel (%p214) target = $region16
        $region15: #{tpu_custom_call.1} parent=11 // pred_region
          %218 = vsyncadd [#allocation6], 0
          %s219 = sshll.u32 %s1, 4
          %s220 = int_to_ptr.hbm [resolvable:$true] %s219
          %s221 = sshll.u32 [#allocation5], 4
          %s222 = int_to_ptr.vmem [resolvable:$true] %s221
          %227 = dma.hbm_to_vmem [thread:$0]  %s220, 12544, %s222, [#allocation6], 128, 128, 8
        $region16: #{tpu_custom_call.1} parent=11 // pred_fallthru
          _
        // Predicated region
        $region17: #{tpu_custom_call.1} parent=11 // pred_check
          %p228 = pneg %p89
        $region18: #{tpu_custom_call.1} parent=11 // pred_check_branch
          %230 = sbr.rel (%p228) target = $region20
        $region19: #{tpu_custom_call.1} parent=11 // pred_region
          %232 = vsyncadd [#allocation6], 0
          %s234 = sshll.u32 %s2, 4
          %s235 = int_to_ptr.hbm [resolvable:$true] %s234
          %s236 = sshll.u32 [#allocation7], 4
          %s237 = int_to_ptr.vmem [resolvable:$true] %s236
          %239 = dma.hbm_to_vmem [thread:$0]  %s235, 32, %s237, [#allocation6]
        $region20: #{tpu_custom_call.1} parent=11 // pred_fallthru
          _
        // Predicated region
        $region21: #{tpu_custom_call.1} parent=11 // pred_check
          %p240 = pneg %p110
        $region22: #{tpu_custom_call.1} parent=11 // pred_check_branch
          %242 = sbr.rel (%p240) target = $region24
        $region23: #{tpu_custom_call.1} parent=11 // pred_region
          %244 = vsyncadd [#allocation9], 0
          %s245 = sshll.u32 %s3, 4
          %s246 = int_to_ptr.hbm [resolvable:$true] %s245
          %s247 = sshll.u32 [#allocation8], 4
          %s248 = int_to_ptr.vmem [resolvable:$true] %s247
          %253 = dma.hbm_to_vmem [thread:$0]  %s246, 4096, %s248, [#allocation9], 128, 128, 8
        $region24: #{tpu_custom_call.1} parent=11 // pred_fallthru
          _
        // Predicated region
        $region25: #{tpu_custom_call.1} parent=11 // pred_check
          %p254 = pneg %p131
        $region26: #{tpu_custom_call.1} parent=11 // pred_check_branch
          %256 = sbr.rel (%p254) target = $region28
        $region27: #{tpu_custom_call.1} parent=11 // pred_region
          _
        $region28: #{tpu_custom_call.1} parent=11 // pred_fallthru
          _
        // Predicated region
        $region29: #{tpu_custom_call.1} parent=11 // pred_check
          %p257 = pneg %p152
        $region30: #{tpu_custom_call.1} parent=11 // pred_check_branch
          %259 = sbr.rel (%p257) target = $region32
        $region31: #{tpu_custom_call.1} parent=11 // pred_region
          %261 = vsyncadd [#allocation9], 0
          %s262 = sshll.u32 %s5, 4
          %s263 = int_to_ptr.hbm [resolvable:$true] %s262
          %s264 = sshll.u32 [#allocation10], 4
          %s265 = int_to_ptr.vmem [resolvable:$true] %s264
          %270 = dma.hbm_to_vmem [thread:$0]  %s263, 2048, %s265, [#allocation9], 64, 64, 4
        $region32: #{tpu_custom_call.1} parent=11 // pred_fallthru
          _
        // Predicated region
        $region33: #{tpu_custom_call.1} parent=11 // pred_check
          %p271 = pneg %p173
        $region34: #{tpu_custom_call.1} parent=11 // pred_check_branch
          %273 = sbr.rel (%p271) target = $region36
        $region35: #{tpu_custom_call.1} parent=11 // pred_region
          _
        $region36: #{tpu_custom_call.1} parent=11 // pred_fallthru
          _
      $region12: #{tpu_custom_call.1} parent=5 // pred_fallthru
        _
      %p274 = scmp.lt.s32.totalorder %s21, 2
      // Predicated region
      $region37: #{tpu_custom_call.1} parent=5 // pred_check
        %p275 = pneg %p274
      $region38: #{tpu_custom_call.1} parent=5 // pred_check_branch
        %277 = sbr.rel (%p275) target = $region40
      $region39: #{tpu_custom_call.1} parent=5 // pred_region
        // Predicated region
        $region41: #{tpu_custom_call.1} parent=39 // pred_check
          %p278 = pneg %p41
        $region42: #{tpu_custom_call.1} parent=39 // pred_check_branch
          %280 = sbr.rel (%p278) target = $region44
        $region43: #{tpu_custom_call.1} parent=39 // pred_region
          %s281 = sand.u32 %s31, 1
          %s282 = scalar_lea.sflag [#allocation3], %s281
          %s283 = sand.u32 %s31, 1
          %s284 = smul.addr %s283, 112
          %s285 = scalar_lea.vmem [#allocation2], %s284
          %s286 = smul.u32 2, %s21
          %288 = vsyncadd %s282, 0
          %s289 = smul.addr %s286, 7
          %s290 = smul.addr %s289, 8
          %s291 = scalar_lea.hbm %s0, %s290
          %s292 = sshll.u32 %s291, 4
          %s293 = int_to_ptr.hbm [resolvable:$true] %s292
          %s294 = sshll.u32 %s285, 4
          %s295 = int_to_ptr.vmem [resolvable:$true] %s294
          %300 = dma.hbm_to_vmem [thread:$0]  %s293, 1792, %s295, %s282, 896, 896, 56
        $region44: #{tpu_custom_call.1} parent=39 // pred_fallthru
          _
      $region40: #{tpu_custom_call.1} parent=5 // pred_fallthru
        _
      %p301 = scmp.le.s32.totalorder 1, %s21
      %p302 = scmp.lt.s32.totalorder %s21, 3
      %p303 = pnand %p301, %p302
      %p304 = pneg %p303
      // Predicated region
      $region45: #{tpu_custom_call.1} parent=5 // pred_check
        _
      $region46: #{tpu_custom_call.1} parent=5 // pred_check_branch
        %306 = sbr.rel (%p303) target = $region48
      $region47: #{tpu_custom_call.1} parent=5 // pred_region
        %s307 = ssub.s32 %s21, 1
        %s308 = sand.u32 %s34, 1
        %s309 = scalar_lea.sflag [#allocation3], %s308
        %s310 = sand.u32 %s34, 1
        %s311 = smul.addr %s310, 112
        %s312 = scalar_lea.vmem [#allocation2], %s311
        // Predicated region
        $region49: #{tpu_custom_call.1} parent=47 // pred_check
          %p313 = pneg %p47
        $region50: #{tpu_custom_call.1} parent=47 // pred_check_branch
          %315 = sbr.rel (%p313) target = $region52
        $region51: #{tpu_custom_call.1} parent=47 // pred_region
          %317 = dma.done %s309, 1792
        $region52: #{tpu_custom_call.1} parent=47 // pred_fallthru
          _
        // Predicated region
        $region53: #{tpu_custom_call.1} parent=47 // pred_check
          %p318 = pneg %p68
        $region54: #{tpu_custom_call.1} parent=47 // pred_check_branch
          %320 = sbr.rel (%p318) target = $region56
        $region55: #{tpu_custom_call.1} parent=47 // pred_region
          %322 = dma.done [#allocation6], 12544
        $region56: #{tpu_custom_call.1} parent=47 // pred_fallthru
          _
        // Predicated region
        $region57: #{tpu_custom_call.1} parent=47 // pred_check
          %p323 = pneg %p89
        $region58: #{tpu_custom_call.1} parent=47 // pred_check_branch
          %325 = sbr.rel (%p323) target = $region60
        $region59: #{tpu_custom_call.1} parent=47 // pred_region
          %327 = dma.done [#allocation6], 32
        $region60: #{tpu_custom_call.1} parent=47 // pred_fallthru
          _
        // Predicated region
        $region61: #{tpu_custom_call.1} parent=47 // pred_check
          %p328 = pneg %p110
        $region62: #{tpu_custom_call.1} parent=47 // pred_check_branch
          %330 = sbr.rel (%p328) target = $region64
        $region63: #{tpu_custom_call.1} parent=47 // pred_region
          %332 = dma.done [#allocation9], 4096
        $region64: #{tpu_custom_call.1} parent=47 // pred_fallthru
          _
        // Predicated region
        $region65: #{tpu_custom_call.1} parent=47 // pred_check
          %p333 = pneg %p152
        $region66: #{tpu_custom_call.1} parent=47 // pred_check_branch
          %335 = sbr.rel (%p333) target = $region68
        $region67: #{tpu_custom_call.1} parent=47 // pred_region
          %337 = dma.done [#allocation9], 2048
        $region68: #{tpu_custom_call.1} parent=47 // pred_fallthru
          _
        %s338 = sand.u32 %s34, 1
        %s339 = scalar_lea.sflag [#allocation3], %s338
        %s340 = sand.u32 %s34, 1
        %s341 = smul.addr %s340, 112
        %s342 = scalar_lea.vmem [#allocation2], %s341
        %p343 = pneg %p47
        %p344 = pneg %p44
        %p345 = pneg %p68
        %p346 = pneg %p65
        %p347 = pneg %p89
        %p348 = pneg %p86
        %p349 = pneg %p110
        %p350 = pneg %p107
        %p351 = pneg %p131
        %p352 = pneg %p128
        %p353 = pneg %p152
        %p354 = pneg %p149
        %p355 = pneg %p173
        %p356 = pneg %p170
        %p357 = pneg %p199
        %p358 = pneg %p196
        %s359 = sand.u32 %s186, 1
        %s360 = scalar_lea.sflag [#allocation4], %s359
        %s361 = sand.u32 %s186, 1
        %s362 = smul.addr %s361, 8
        %s363 = scalar_lea.vmem [#allocation11], %s362
        %s364 = smul.u32 2, %s26
        %s365 = smul.u32 2, %s26
        %v367 = vld [vmem:[%s312] sm:$0xff]
        %v368 = vld [vmem:[%s312 + $0x8] sm:$0xff]
        %v369 = vld [vmem:[%s312 + $0x10] sm:$0xff]
        %v370 = vld [vmem:[%s312 + $0x18] sm:$0xff]
        %v371 = vld [vmem:[%s312 + $0x20] sm:$0xff]
        %v372 = vld [vmem:[%s312 + $0x28] sm:$0xff]
        %v373 = vld [vmem:[%s312 + $0x30] sm:$0xff]
        %v374 = vld [vmem:[%s312 + $0x38] sm:$0xff]
        %v375 = vld [vmem:[%s312 + $0x40] sm:$0xff]
        %v376 = vld [vmem:[%s312 + $0x48] sm:$0xff]
        %v377 = vld [vmem:[%s312 + $0x50] sm:$0xff]
        %v378 = vld [vmem:[%s312 + $0x58] sm:$0xff]
        %v379 = vld [vmem:[%s312 + $0x60] sm:$0xff]
        %v380 = vld [vmem:[%s312 + $0x68] sm:$0xff]
        %v381 = vpack.c.bf16 %v374, %v367
        %v382 = vpack.c.bf16 %v375, %v368
        %v383 = vpack.c.bf16 %v376, %v369
        %v384 = vpack.c.bf16 %v377, %v370
        %v385 = vpack.c.bf16 %v378, %v371
        %v386 = vpack.c.bf16 %v379, %v372
        %v387 = vpack.c.bf16 %v380, %v373
        %v388 = vld [vmem:[#allocation5] sm:$0xff]
        %v389 = vld [vmem:[#allocation5 + $0x8] sm:$0xff]
        %v390 = vld [vmem:[#allocation5 + $0x10] sm:$0xff]
        %v391 = vld [vmem:[#allocation5 + $0x18] sm:$0xff]
        %v392 = vld [vmem:[#allocation5 + $0x20] sm:$0xff]
        %v393 = vld [vmem:[#allocation5 + $0x28] sm:$0xff]
        %v394 = vld [vmem:[#allocation5 + $0x30] sm:$0xff]
        %v395 = vld [vmem:[#allocation5 + $0x38] sm:$0xff]
        %v396 = vld [vmem:[#allocation5 + $0x40] sm:$0xff]
        %v397 = vld [vmem:[#allocation5 + $0x48] sm:$0xff]
        %v398 = vld [vmem:[#allocation5 + $0x50] sm:$0xff]
        %v399 = vld [vmem:[#allocation5 + $0x58] sm:$0xff]
        %v400 = vld [vmem:[#allocation5 + $0x60] sm:$0xff]
        %v401 = vld [vmem:[#allocation5 + $0x68] sm:$0xff]
        %v402 = vld [vmem:[#allocation5 + $0x70] sm:$0xff]
        %v403 = vld [vmem:[#allocation5 + $0x78] sm:$0xff]
        %v404 = vld [vmem:[#allocation5 + $0x80] sm:$0xff]
        %v405 = vld [vmem:[#allocation5 + $0x88] sm:$0xff]
        %v406 = vld [vmem:[#allocation5 + $0x90] sm:$0xff]
        %v407 = vld [vmem:[#allocation5 + $0x98] sm:$0xff]
        %v408 = vld [vmem:[#allocation5 + $0xa0] sm:$0xff]
        %v409 = vld [vmem:[#allocation5 + $0xa8] sm:$0xff]
        %v410 = vld [vmem:[#allocation5 + $0xb0] sm:$0xff]
        %v411 = vld [vmem:[#allocation5 + $0xb8] sm:$0xff]
        %v412 = vld [vmem:[#allocation5 + $0xc0] sm:$0xff]
        %v413 = vld [vmem:[#allocation5 + $0xc8] sm:$0xff]
        %v414 = vld [vmem:[#allocation5 + $0xd0] sm:$0xff]
        %v415 = vld [vmem:[#allocation5 + $0xd8] sm:$0xff]
        %v416 = vld [vmem:[#allocation5 + $0xe0] sm:$0xff]
        %v417 = vld [vmem:[#allocation5 + $0xe8] sm:$0xff]
        %v418 = vld [vmem:[#allocation5 + $0xf0] sm:$0xff]
        %v419 = vld [vmem:[#allocation5 + $0xf8] sm:$0xff]
        %v420 = vld [vmem:[#allocation5 + $0x100] sm:$0xff]
        %v421 = vld [vmem:[#allocation5 + $0x108] sm:$0xff]
        %v422 = vld [vmem:[#allocation5 + $0x110] sm:$0xff]
        %v423 = vld [vmem:[#allocation5 + $0x118] sm:$0xff]
        %v424 = vld [vmem:[#allocation5 + $0x120] sm:$0xff]
        %v425 = vld [vmem:[#allocation5 + $0x128] sm:$0xff]
        %v426 = vld [vmem:[#allocation5 + $0x130] sm:$0xff]
        %v427 = vld [vmem:[#allocation5 + $0x138] sm:$0xff]
        %v428 = vld [vmem:[#allocation5 + $0x140] sm:$0xff]
        %v429 = vld [vmem:[#allocation5 + $0x148] sm:$0xff]
        %v430 = vld [vmem:[#allocation5 + $0x150] sm:$0xff]
        %v431 = vld [vmem:[#allocation5 + $0x158] sm:$0xff]
        %v432 = vld [vmem:[#allocation5 + $0x160] sm:$0xff]
        %v433 = vld [vmem:[#allocation5 + $0x168] sm:$0xff]
        %v434 = vld [vmem:[#allocation5 + $0x170] sm:$0xff]
        %v435 = vld [vmem:[#allocation5 + $0x178] sm:$0xff]
        %v436 = vld [vmem:[#allocation5 + $0x180] sm:$0xff]
        %v437 = vld [vmem:[#allocation5 + $0x188] sm:$0xff]
        %v438 = vld [vmem:[#allocation5 + $0x190] sm:$0xff]
        %v439 = vld [vmem:[#allocation5 + $0x198] sm:$0xff]
        %v440 = vld [vmem:[#allocation5 + $0x1a0] sm:$0xff]
        %v441 = vld [vmem:[#allocation5 + $0x1a8] sm:$0xff]
        %v442 = vld [vmem:[#allocation5 + $0x1b0] sm:$0xff]
        %v443 = vld [vmem:[#allocation5 + $0x1b8] sm:$0xff]
        %v444 = vld [vmem:[#allocation5 + $0x1c0] sm:$0xff]
        %v445 = vld [vmem:[#allocation5 + $0x1c8] sm:$0xff]
        %v446 = vld [vmem:[#allocation5 + $0x1d0] sm:$0xff]
        %v447 = vld [vmem:[#allocation5 + $0x1d8] sm:$0xff]
        %v448 = vld [vmem:[#allocation5 + $0x1e0] sm:$0xff]
        %v449 = vld [vmem:[#allocation5 + $0x1e8] sm:$0xff]
        %v450 = vld [vmem:[#allocation5 + $0x1f0] sm:$0xff]
        %v451 = vld [vmem:[#allocation5 + $0x1f8] sm:$0xff]
        %v452 = vld [vmem:[#allocation5 + $0x200] sm:$0xff]
        %v453 = vld [vmem:[#allocation5 + $0x208] sm:$0xff]
        %v454 = vld [vmem:[#allocation5 + $0x210] sm:$0xff]
        %v455 = vld [vmem:[#allocation5 + $0x218] sm:$0xff]
        %v456 = vld [vmem:[#allocation5 + $0x220] sm:$0xff]
        %v457 = vld [vmem:[#allocation5 + $0x228] sm:$0xff]
        %v458 = vld [vmem:[#allocation5 + $0x230] sm:$0xff]
        %v459 = vld [vmem:[#allocation5 + $0x238] sm:$0xff]
        %v460 = vld [vmem:[#allocation5 + $0x240] sm:$0xff]
        %v461 = vld [vmem:[#allocation5 + $0x248] sm:$0xff]
        %v462 = vld [vmem:[#allocation5 + $0x250] sm:$0xff]
        %v463 = vld [vmem:[#allocation5 + $0x258] sm:$0xff]
        %v464 = vld [vmem:[#allocation5 + $0x260] sm:$0xff]
        %v465 = vld [vmem:[#allocation5 + $0x268] sm:$0xff]
        %v466 = vld [vmem:[#allocation5 + $0x270] sm:$0xff]
        %v467 = vld [vmem:[#allocation5 + $0x278] sm:$0xff]
        %v468 = vld [vmem:[#allocation5 + $0x280] sm:$0xff]
        %v469 = vld [vmem:[#allocation5 + $0x288] sm:$0xff]
        %v470 = vld [vmem:[#allocation5 + $0x290] sm:$0xff]
        %v471 = vld [vmem:[#allocation5 + $0x298] sm:$0xff]
        %v472 = vld [vmem:[#allocation5 + $0x2a0] sm:$0xff]
        %v473 = vld [vmem:[#allocation5 + $0x2a8] sm:$0xff]
        %v474 = vld [vmem:[#allocation5 + $0x2b0] sm:$0xff]
        %v475 = vld [vmem:[#allocation5 + $0x2b8] sm:$0xff]
        %v476 = vld [vmem:[#allocation5 + $0x2c0] sm:$0xff]
        %v477 = vld [vmem:[#allocation5 + $0x2c8] sm:$0xff]
        %v478 = vld [vmem:[#allocation5 + $0x2d0] sm:$0xff]
        %v479 = vld [vmem:[#allocation5 + $0x2d8] sm:$0xff]
        %v480 = vld [vmem:[#allocation5 + $0x2e0] sm:$0xff]
        %v481 = vld [vmem:[#allocation5 + $0x2e8] sm:$0xff]
        %v482 = vld [vmem:[#allocation5 + $0x2f0] sm:$0xff]
        %v483 = vld [vmem:[#allocation5 + $0x2f8] sm:$0xff]
        %v484 = vld [vmem:[#allocation5 + $0x300] sm:$0xff]
        %v485 = vld [vmem:[#allocation5 + $0x308] sm:$0xff]
        %v486 = vld [vmem:[#allocation7] sm:$0x3]
        %v488 = vperm.slane %v486, 0
        %v489 = vperm.slane %v486, 1
        %v590 = vunpack.c.l.b16 %v388
        %v591 = vunpack.c.h.b16 %v388
        %v592 = vunpack.c.l.b16 %v389
        %v593 = vunpack.c.h.b16 %v389
        %v594 = vunpack.c.l.b16 %v390
        %v595 = vunpack.c.h.b16 %v390
        %v596 = vunpack.c.l.b16 %v391
        %v597 = vunpack.c.h.b16 %v391
        %v598 = vunpack.c.l.b16 %v392
        %v599 = vunpack.c.h.b16 %v392
        %v600 = vunpack.c.l.b16 %v393
        %v601 = vunpack.c.h.b16 %v393
        %v602 = vunpack.c.l.b16 %v394
        %v603 = vunpack.c.h.b16 %v394
        %v604 = vunpack.c.l.b16 %v395
        %v605 = vunpack.c.h.b16 %v395
        %v606 = vunpack.c.l.b16 %v396
        %v607 = vunpack.c.h.b16 %v396
        %v608 = vunpack.c.l.b16 %v397
        %v609 = vunpack.c.h.b16 %v397
        %v610 = vunpack.c.l.b16 %v398
        %v611 = vunpack.c.h.b16 %v398
        %v612 = vunpack.c.l.b16 %v399
        %v613 = vunpack.c.h.b16 %v399
        %v614 = vunpack.c.l.b16 %v400
        %v615 = vunpack.c.h.b16 %v400
        %v616 = vunpack.c.l.b16 %v401
        %v617 = vunpack.c.h.b16 %v401
        %v618 = vunpack.c.l.b16 %v402
        %v619 = vunpack.c.h.b16 %v402
        %v620 = vunpack.c.l.b16 %v403
        %v621 = vunpack.c.h.b16 %v403
        %v622 = vunpack.c.l.b16 %v404
        %v623 = vunpack.c.h.b16 %v404
        %v624 = vunpack.c.l.b16 %v405
        %v625 = vunpack.c.h.b16 %v405
        %v626 = vunpack.c.l.b16 %v406
        %v627 = vunpack.c.h.b16 %v406
        %v628 = vunpack.c.l.b16 %v407
        %v629 = vunpack.c.h.b16 %v407
        %v630 = vunpack.c.l.b16 %v408
        %v631 = vunpack.c.h.b16 %v408
        %v632 = vunpack.c.l.b16 %v409
        %v633 = vunpack.c.h.b16 %v409
        %v634 = vunpack.c.l.b16 %v410
        %v635 = vunpack.c.h.b16 %v410
        %v636 = vunpack.c.l.b16 %v411
        %v637 = vunpack.c.h.b16 %v411
        %v638 = vunpack.c.l.b16 %v412
        %v639 = vunpack.c.h.b16 %v412
        %v640 = vunpack.c.l.b16 %v413
        %v641 = vunpack.c.h.b16 %v413
        %v642 = vunpack.c.l.b16 %v414
        %v643 = vunpack.c.h.b16 %v414
        %v644 = vunpack.c.l.b16 %v415
        %v645 = vunpack.c.h.b16 %v415
        %v646 = vunpack.c.l.b16 %v416
        %v647 = vunpack.c.h.b16 %v416
        %v648 = vunpack.c.l.b16 %v417
        %v649 = vunpack.c.h.b16 %v417
        %v650 = vunpack.c.l.b16 %v418
        %v651 = vunpack.c.h.b16 %v418
        %v652 = vunpack.c.l.b16 %v419
        %v653 = vunpack.c.h.b16 %v419
        %v654 = vunpack.c.l.b16 %v420
        %v655 = vunpack.c.h.b16 %v420
        %v656 = vunpack.c.l.b16 %v421
        %v657 = vunpack.c.h.b16 %v421
        %v658 = vunpack.c.l.b16 %v422
        %v659 = vunpack.c.h.b16 %v422
        %v660 = vunpack.c.l.b16 %v423
        %v661 = vunpack.c.h.b16 %v423
        %v662 = vunpack.c.l.b16 %v424
        %v663 = vunpack.c.h.b16 %v424
        %v664 = vunpack.c.l.b16 %v425
        %v665 = vunpack.c.h.b16 %v425
        %v666 = vunpack.c.l.b16 %v426
        %v667 = vunpack.c.h.b16 %v426
        %v668 = vunpack.c.l.b16 %v427
        %v669 = vunpack.c.h.b16 %v427
        %v670 = vunpack.c.l.b16 %v428
        %v671 = vunpack.c.h.b16 %v428
        %v672 = vunpack.c.l.b16 %v429
        %v673 = vunpack.c.h.b16 %v429
        %v674 = vunpack.c.l.b16 %v430
        %v675 = vunpack.c.h.b16 %v430
        %v676 = vunpack.c.l.b16 %v431
        %v677 = vunpack.c.h.b16 %v431
        %v678 = vunpack.c.l.b16 %v432
        %v679 = vunpack.c.h.b16 %v432
        %v680 = vunpack.c.l.b16 %v433
        %v681 = vunpack.c.h.b16 %v433
        %v682 = vunpack.c.l.b16 %v434
        %v683 = vunpack.c.h.b16 %v434
        %v684 = vunpack.c.l.b16 %v435
        %v685 = vunpack.c.h.b16 %v435
        %v686 = vunpack.c.l.b16 %v436
        %v687 = vunpack.c.h.b16 %v436
        %v688 = vunpack.c.l.b16 %v437
        %v689 = vunpack.c.h.b16 %v437
        %v690 = vunpack.c.l.b16 %v438
        %v691 = vunpack.c.h.b16 %v438
        %v692 = vunpack.c.l.b16 %v439
        %v693 = vunpack.c.h.b16 %v439
        %v694 = vunpack.c.l.b16 %v440
        %v695 = vunpack.c.h.b16 %v440
        %v696 = vunpack.c.l.b16 %v441
        %v697 = vunpack.c.h.b16 %v441
        %v698 = vunpack.c.l.b16 %v442
        %v699 = vunpack.c.h.b16 %v442
        %v700 = vunpack.c.l.b16 %v443
        %v701 = vunpack.c.h.b16 %v443
        %v702 = vunpack.c.l.b16 %v444
        %v703 = vunpack.c.h.b16 %v444
        %v704 = vunpack.c.l.b16 %v445
        %v705 = vunpack.c.h.b16 %v445
        %v706 = vunpack.c.l.b16 %v446
        %v707 = vunpack.c.h.b16 %v446
        %v708 = vunpack.c.l.b16 %v447
        %v709 = vunpack.c.h.b16 %v447
        %v710 = vunpack.c.l.b16 %v448
        %v711 = vunpack.c.h.b16 %v448
        %v712 = vunpack.c.l.b16 %v449
        %v713 = vunpack.c.h.b16 %v449
        %v714 = vunpack.c.l.b16 %v450
        %v715 = vunpack.c.h.b16 %v450
        %v716 = vunpack.c.l.b16 %v451
        %v717 = vunpack.c.h.b16 %v451
        %v718 = vunpack.c.l.b16 %v452
        %v719 = vunpack.c.h.b16 %v452
        %v720 = vunpack.c.l.b16 %v453
        %v721 = vunpack.c.h.b16 %v453
        %v722 = vunpack.c.l.b16 %v454
        %v723 = vunpack.c.h.b16 %v454
        %v724 = vunpack.c.l.b16 %v455
        %v725 = vunpack.c.h.b16 %v455
        %v726 = vunpack.c.l.b16 %v456
        %v727 = vunpack.c.h.b16 %v456
        %v728 = vunpack.c.l.b16 %v457
        %v729 = vunpack.c.h.b16 %v457
        %v730 = vunpack.c.l.b16 %v458
        %v731 = vunpack.c.h.b16 %v458
        %v732 = vunpack.c.l.b16 %v459
        %v733 = vunpack.c.h.b16 %v459
        %v734 = vunpack.c.l.b16 %v460
        %v735 = vunpack.c.h.b16 %v460
        %v736 = vunpack.c.l.b16 %v461
        %v737 = vunpack.c.h.b16 %v461
        %v738 = vunpack.c.l.b16 %v462
        %v739 = vunpack.c.h.b16 %v462
        %v740 = vunpack.c.l.b16 %v463
        %v741 = vunpack.c.h.b16 %v463
        %v742 = vunpack.c.l.b16 %v464
        %v743 = vunpack.c.h.b16 %v464
        %v744 = vunpack.c.l.b16 %v465
        %v745 = vunpack.c.h.b16 %v465
        %v746 = vunpack.c.l.b16 %v466
        %v747 = vunpack.c.h.b16 %v466
        %v748 = vunpack.c.l.b16 %v467
        %v749 = vunpack.c.h.b16 %v467
        %v750 = vunpack.c.l.b16 %v468
        %v751 = vunpack.c.h.b16 %v468
        %v752 = vunpack.c.l.b16 %v469
        %v753 = vunpack.c.h.b16 %v469
        %v754 = vunpack.c.l.b16 %v470
        %v755 = vunpack.c.h.b16 %v470
        %v756 = vunpack.c.l.b16 %v471
        %v757 = vunpack.c.h.b16 %v471
        %v758 = vunpack.c.l.b16 %v472
        %v759 = vunpack.c.h.b16 %v472
        %v760 = vunpack.c.l.b16 %v473
        %v761 = vunpack.c.h.b16 %v473
        %v762 = vunpack.c.l.b16 %v474
        %v763 = vunpack.c.h.b16 %v474
        %v764 = vunpack.c.l.b16 %v475
        %v765 = vunpack.c.h.b16 %v475
        %v766 = vunpack.c.l.b16 %v476
        %v767 = vunpack.c.h.b16 %v476
        %v768 = vunpack.c.l.b16 %v477
        %v769 = vunpack.c.h.b16 %v477
        %v770 = vunpack.c.l.b16 %v478
        %v771 = vunpack.c.h.b16 %v478
        %v772 = vunpack.c.l.b16 %v479
        %v773 = vunpack.c.h.b16 %v479
        %v774 = vunpack.c.l.b16 %v480
        %v775 = vunpack.c.h.b16 %v480
        %v776 = vunpack.c.l.b16 %v481
        %v777 = vunpack.c.h.b16 %v481
        %v778 = vunpack.c.l.b16 %v482
        %v779 = vunpack.c.h.b16 %v482
        %v780 = vunpack.c.l.b16 %v483
        %v781 = vunpack.c.h.b16 %v483
        %v782 = vunpack.c.l.b16 %v484
        %v783 = vunpack.c.h.b16 %v484
        %v784 = vunpack.c.l.b16 %v485
        %v785 = vunpack.c.h.b16 %v485
        %v786 = vpack.c.b16 %v592, %v590
        %v787 = vpack.c.b16 %v593, %v591
        %v788 = vpack.c.b16 %v596, %v594
        %v789 = vpack.c.b16 %v597, %v595
        %v790 = vpack.c.b16 %v600, %v598
        %v791 = vpack.c.b16 %v601, %v599
        %v792 = vpack.c.b16 %v604, %v602
        %v793 = vpack.c.b16 %v605, %v603
        %v794 = vpack.c.b16 %v608, %v606
        %v795 = vpack.c.b16 %v609, %v607
        %v796 = vpack.c.b16 %v612, %v610
        %v797 = vpack.c.b16 %v613, %v611
        %v798 = vpack.c.b16 %v616, %v614
        %v799 = vpack.c.b16 %v617, %v615
        %v800 = vpack.c.b16 %v620, %v618
        %v801 = vpack.c.b16 %v621, %v619
        %v802 = vpack.c.b16 %v624, %v622
        %v803 = vpack.c.b16 %v625, %v623
        %v804 = vpack.c.b16 %v628, %v626
        %v805 = vpack.c.b16 %v629, %v627
        %v806 = vpack.c.b16 %v632, %v630
        %v807 = vpack.c.b16 %v633, %v631
        %v808 = vpack.c.b16 %v636, %v634
        %v809 = vpack.c.b16 %v637, %v635
        %v810 = vpack.c.b16 %v640, %v638
        %v811 = vpack.c.b16 %v641, %v639
        %v812 = vpack.c.b16 %v644, %v642
        %v813 = vpack.c.b16 %v645, %v643
        %v814 = vpack.c.b16 %v648, %v646
        %v815 = vpack.c.b16 %v649, %v647
        %v816 = vpack.c.b16 %v652, %v650
        %v817 = vpack.c.b16 %v653, %v651
        %v818 = vpack.c.b16 %v656, %v654
        %v819 = vpack.c.b16 %v657, %v655
        %v820 = vpack.c.b16 %v660, %v658
        %v821 = vpack.c.b16 %v661, %v659
        %v822 = vpack.c.b16 %v664, %v662
        %v823 = vpack.c.b16 %v665, %v663
        %v824 = vpack.c.b16 %v668, %v666
        %v825 = vpack.c.b16 %v669, %v667
        %v826 = vpack.c.b16 %v672, %v670
        %v827 = vpack.c.b16 %v673, %v671
        %v828 = vpack.c.b16 %v676, %v674
        %v829 = vpack.c.b16 %v677, %v675
        %v830 = vpack.c.b16 %v680, %v678
        %v831 = vpack.c.b16 %v681, %v679
        %v832 = vpack.c.b16 %v684, %v682
        %v833 = vpack.c.b16 %v685, %v683
        %v834 = vpack.c.b16 %v688, %v686
        %v835 = vpack.c.b16 %v689, %v687
        %v836 = vpack.c.b16 %v692, %v690
        %v837 = vpack.c.b16 %v693, %v691
        %v838 = vpack.c.b16 %v696, %v694
        %v839 = vpack.c.b16 %v697, %v695
        %v840 = vpack.c.b16 %v700, %v698
        %v841 = vpack.c.b16 %v701, %v699
        %v842 = vpack.c.b16 %v704, %v702
        %v843 = vpack.c.b16 %v705, %v703
        %v844 = vpack.c.b16 %v708, %v706
        %v845 = vpack.c.b16 %v709, %v707
        %v846 = vpack.c.b16 %v712, %v710
        %v847 = vpack.c.b16 %v713, %v711
        %v848 = vpack.c.b16 %v716, %v714
        %v849 = vpack.c.b16 %v717, %v715
        %v850 = vpack.c.b16 %v720, %v718
        %v851 = vpack.c.b16 %v721, %v719
        %v852 = vpack.c.b16 %v724, %v722
        %v853 = vpack.c.b16 %v725, %v723
        %v854 = vpack.c.b16 %v728, %v726
        %v855 = vpack.c.b16 %v729, %v727
        %v856 = vpack.c.b16 %v732, %v730
        %v857 = vpack.c.b16 %v733, %v731
        %v858 = vpack.c.b16 %v736, %v734
        %v859 = vpack.c.b16 %v737, %v735
        %v860 = vpack.c.b16 %v740, %v738
        %v861 = vpack.c.b16 %v741, %v739
        %v862 = vpack.c.b16 %v744, %v742
        %v863 = vpack.c.b16 %v745, %v743
        %v864 = vpack.c.b16 %v748, %v746
        %v865 = vpack.c.b16 %v749, %v747
        %v866 = vpack.c.b16 %v752, %v750
        %v867 = vpack.c.b16 %v753, %v751
        %v868 = vpack.c.b16 %v756, %v754
        %v869 = vpack.c.b16 %v757, %v755
        %v870 = vpack.c.b16 %v760, %v758
        %v871 = vpack.c.b16 %v761, %v759
        %v872 = vpack.c.b16 %v764, %v762
        %v873 = vpack.c.b16 %v765, %v763
        %v874 = vpack.c.b16 %v768, %v766
        %v875 = vpack.c.b16 %v769, %v767
        %v876 = vpack.c.b16 %v772, %v770
        %v877 = vpack.c.b16 %v773, %v771
        %v878 = vpack.c.b16 %v776, %v774
        %v879 = vpack.c.b16 %v777, %v775
        %v880 = vpack.c.b16 %v780, %v778
        %v881 = vpack.c.b16 %v781, %v779
        %v882 = vpack.c.b16 %v784, %v782
        %v883 = vpack.c.b16 %v785, %v783
        %vm982 = vcmask 130048
        %v984 = vsel %vm982, %v387, 0
        %986 = vmatpush.bf16.msra.mxu0 %v800
        %987 = vmatpush.bf16.msra.mxu0 %v798
        %988 = vmatpush.bf16.msra.mxu0 %v796
        %989 = vmatpush.bf16.msra.mxu0 %v794
        %990 = vmatpush.bf16.msra.mxu0 %v792
        %991 = vmatpush.bf16.msra.mxu0 %v790
        %992 = vmatpush.bf16.msra.mxu0 %v788
        %993 = vmatpush.bf16.msra.mxu0 %v786
        %994 = vmatmul.bf16.gmra.mxu0 %v381
        %v995 = vpop.f32.mrf.mxu0
        %v996 = vadd.f32 %v488, %v995
        %v997 = vpop.f32.mrf.mxu0
        %v998 = vadd.f32 %v488, %v997
        %999 = vdwg.mxu0
        %1000 = vmatpush.bf16.msra.mxu0 %v816
        %1001 = vmatpush.bf16.msra.mxu0 %v814
        %1002 = vmatpush.bf16.msra.mxu0 %v812
        %1003 = vmatpush.bf16.msra.mxu0 %v810
        %1004 = vmatpush.bf16.msra.mxu0 %v808
        %1005 = vmatpush.bf16.msra.mxu0 %v806
        %1006 = vmatpush.bf16.msra.mxu0 %v804
        %1007 = vmatpush.bf16.msra.mxu0 %v802
        %1008 = vmatmul.bf16.gmra.mxu0 %v382
        %v1009 = vpop.f32.mrf.mxu0
        %v1010 = vadd.f32 %v996, %v1009
        %v1011 = vpop.f32.mrf.mxu0
        %v1012 = vadd.f32 %v998, %v1011
        %1013 = vdwg.mxu0
        %1014 = vmatpush.bf16.msra.mxu0 %v832
        %1015 = vmatpush.bf16.msra.mxu0 %v830
        %1016 = vmatpush.bf16.msra.mxu0 %v828
        %1017 = vmatpush.bf16.msra.mxu0 %v826
        %1018 = vmatpush.bf16.msra.mxu0 %v824
        %1019 = vmatpush.bf16.msra.mxu0 %v822
        %1020 = vmatpush.bf16.msra.mxu0 %v820
        %1021 = vmatpush.bf16.msra.mxu0 %v818
        %1022 = vmatmul.bf16.gmra.mxu0 %v383
        %v1023 = vpop.f32.mrf.mxu0
        %v1024 = vadd.f32 %v1010, %v1023
        %v1025 = vpop.f32.mrf.mxu0
        %v1026 = vadd.f32 %v1012, %v1025
        %1027 = vdwg.mxu0
        %1028 = vmatpush.bf16.msra.mxu0 %v848
        %1029 = vmatpush.bf16.msra.mxu0 %v846
        %1030 = vmatpush.bf16.msra.mxu0 %v844
        %1031 = vmatpush.bf16.msra.mxu0 %v842
        %1032 = vmatpush.bf16.msra.mxu0 %v840
        %1033 = vmatpush.bf16.msra.mxu0 %v838
        %1034 = vmatpush.bf16.msra.mxu0 %v836
        %1035 = vmatpush.bf16.msra.mxu0 %v834
        %1036 = vmatmul.bf16.gmra.mxu0 %v384
        %v1037 = vpop.f32.mrf.mxu0
        %v1038 = vadd.f32 %v1024, %v1037
        %v1039 = vpop.f32.mrf.mxu0
        %v1040 = vadd.f32 %v1026, %v1039
        %1041 = vdwg.mxu0
        %1042 = vmatpush.bf16.msra.mxu0 %v864
        %1043 = vmatpush.bf16.msra.mxu0 %v862
        %1044 = vmatpush.bf16.msra.mxu0 %v860
        %1045 = vmatpush.bf16.msra.mxu0 %v858
        %1046 = vmatpush.bf16.msra.mxu0 %v856
        %1047 = vmatpush.bf16.msra.mxu0 %v854
        %1048 = vmatpush.bf16.msra.mxu0 %v852
        %1049 = vmatpush.bf16.msra.mxu0 %v850
        %1050 = vmatmul.bf16.gmra.mxu0 %v385
        %v1051 = vpop.f32.mrf.mxu0
        %v1052 = vadd.f32 %v1038, %v1051
        %v1053 = vpop.f32.mrf.mxu0
        %v1054 = vadd.f32 %v1040, %v1053
        %1055 = vdwg.mxu0
        %1056 = vmatpush.bf16.msra.mxu0 %v880
        %1057 = vmatpush.bf16.msra.mxu0 %v878
        %1058 = vmatpush.bf16.msra.mxu0 %v876
        %1059 = vmatpush.bf16.msra.mxu0 %v874
        %1060 = vmatpush.bf16.msra.mxu0 %v872
        %1061 = vmatpush.bf16.msra.mxu0 %v870
        %1062 = vmatpush.bf16.msra.mxu0 %v868
        %1063 = vmatpush.bf16.msra.mxu0 %v866
        %1064 = vmatmul.bf16.gmra.mxu0 %v386
        %v1065 = vpop.f32.mrf.mxu0
        %v1066 = vadd.f32 %v1052, %v1065
        %v1067 = vpop.f32.mrf.mxu0
        %v1068 = vadd.f32 %v1054, %v1067
        %1069 = vdwg.mxu0
        %1070 = vmatpush.bf16.msra.mxu0 0
        %1071 = vmatpush.bf16.msra.mxu0 0
        %1072 = vmatpush.bf16.msra.mxu0 0
        %1073 = vmatpush.bf16.msra.mxu0 0
        %1074 = vmatpush.bf16.msra.mxu0 0
        %1075 = vmatpush.bf16.msra.mxu0 0
        %1076 = vmatpush.bf16.msra.mxu0 0
        %1077 = vmatpush.bf16.msra.mxu0 %v882
        %1078 = vmatmul.bf16.gmra.mxu0 %v984
        %v1079 = vpop.f32.mrf.mxu0
        %v1080 = vadd.f32 %v1066, %v1079
        %v1081 = vpop.f32.mrf.mxu0
        %v1082 = vadd.f32 %v1068, %v1081
        %1083 = vdwg.mxu0
        %1084 = vmatpush.bf16.msra.mxu0 %v801
        %1085 = vmatpush.bf16.msra.mxu0 %v799
        %1086 = vmatpush.bf16.msra.mxu0 %v797
        %1087 = vmatpush.bf16.msra.mxu0 %v795
        %1088 = vmatpush.bf16.msra.mxu0 %v793
        %1089 = vmatpush.bf16.msra.mxu0 %v791
        %1090 = vmatpush.bf16.msra.mxu0 %v789
        %1091 = vmatpush.bf16.msra.mxu0 %v787
        %1092 = vmatmul.bf16.gmra.mxu0 %v381
        %v1093 = vpop.f32.mrf.mxu0
        %v1094 = vadd.f32 %v489, %v1093
        %v1095 = vpop.f32.mrf.mxu0
        %v1096 = vadd.f32 %v489, %v1095
        %1097 = vdwg.mxu0
        %1098 = vmatpush.bf16.msra.mxu0 %v817
        %1099 = vmatpush.bf16.msra.mxu0 %v815
        %1100 = vmatpush.bf16.msra.mxu0 %v813
        %1101 = vmatpush.bf16.msra.mxu0 %v811
        %1102 = vmatpush.bf16.msra.mxu0 %v809
        %1103 = vmatpush.bf16.msra.mxu0 %v807
        %1104 = vmatpush.bf16.msra.mxu0 %v805
        %1105 = vmatpush.bf16.msra.mxu0 %v803
        %1106 = vmatmul.bf16.gmra.mxu0 %v382
        %v1107 = vpop.f32.mrf.mxu0
        %v1108 = vadd.f32 %v1094, %v1107
        %v1109 = vpop.f32.mrf.mxu0
        %v1110 = vadd.f32 %v1096, %v1109
        %1111 = vdwg.mxu0
        %1112 = vmatpush.bf16.msra.mxu0 %v833
        %1113 = vmatpush.bf16.msra.mxu0 %v831
        %1114 = vmatpush.bf16.msra.mxu0 %v829
        %1115 = vmatpush.bf16.msra.mxu0 %v827
        %1116 = vmatpush.bf16.msra.mxu0 %v825
        %1117 = vmatpush.bf16.msra.mxu0 %v823
        %1118 = vmatpush.bf16.msra.mxu0 %v821
        %1119 = vmatpush.bf16.msra.mxu0 %v819
        %1120 = vmatmul.bf16.gmra.mxu0 %v383
        %v1121 = vpop.f32.mrf.mxu0
        %v1122 = vadd.f32 %v1108, %v1121
        %v1123 = vpop.f32.mrf.mxu0
        %v1124 = vadd.f32 %v1110, %v1123
        %1125 = vdwg.mxu0
        %1126 = vmatpush.bf16.msra.mxu0 %v849
        %1127 = vmatpush.bf16.msra.mxu0 %v847
        %1128 = vmatpush.bf16.msra.mxu0 %v845
        %1129 = vmatpush.bf16.msra.mxu0 %v843
        %1130 = vmatpush.bf16.msra.mxu0 %v841
        %1131 = vmatpush.bf16.msra.mxu0 %v839
        %1132 = vmatpush.bf16.msra.mxu0 %v837
        %1133 = vmatpush.bf16.msra.mxu0 %v835
        %1134 = vmatmul.bf16.gmra.mxu0 %v384
        %v1135 = vpop.f32.mrf.mxu0
        %v1136 = vadd.f32 %v1122, %v1135
        %v1137 = vpop.f32.mrf.mxu0
        %v1138 = vadd.f32 %v1124, %v1137
        %1139 = vdwg.mxu0
        %1140 = vmatpush.bf16.msra.mxu0 %v865
        %1141 = vmatpush.bf16.msra.mxu0 %v863
        %1142 = vmatpush.bf16.msra.mxu0 %v861
        %1143 = vmatpush.bf16.msra.mxu0 %v859
        %1144 = vmatpush.bf16.msra.mxu0 %v857
        %1145 = vmatpush.bf16.msra.mxu0 %v855
        %1146 = vmatpush.bf16.msra.mxu0 %v853
        %1147 = vmatpush.bf16.msra.mxu0 %v851
        %1148 = vmatmul.bf16.gmra.mxu0 %v385
        %v1149 = vpop.f32.mrf.mxu0
        %v1150 = vadd.f32 %v1136, %v1149
        %v1151 = vpop.f32.mrf.mxu0
        %v1152 = vadd.f32 %v1138, %v1151
        %1153 = vdwg.mxu0
        %1154 = vmatpush.bf16.msra.mxu0 %v881
        %1155 = vmatpush.bf16.msra.mxu0 %v879
        %1156 = vmatpush.bf16.msra.mxu0 %v877
        %1157 = vmatpush.bf16.msra.mxu0 %v875
        %1158 = vmatpush.bf16.msra.mxu0 %v873
        %1159 = vmatpush.bf16.msra.mxu0 %v871
        %1160 = vmatpush.bf16.msra.mxu0 %v869
        %1161 = vmatpush.bf16.msra.mxu0 %v867
        %1162 = vmatmul.bf16.gmra.mxu0 %v386
        %v1163 = vpop.f32.mrf.mxu0
        %v1164 = vadd.f32 %v1150, %v1163
        %v1165 = vpop.f32.mrf.mxu0
        %v1166 = vadd.f32 %v1152, %v1165
        %1167 = vdwg.mxu0
        %1168 = vmatpush.bf16.msra.mxu0 0
        %1169 = vmatpush.bf16.msra.mxu0 0
        %1170 = vmatpush.bf16.msra.mxu0 0
        %1171 = vmatpush.bf16.msra.mxu0 0
        %1172 = vmatpush.bf16.msra.mxu0 0
        %1173 = vmatpush.bf16.msra.mxu0 0
        %1174 = vmatpush.bf16.msra.mxu0 0
        %1175 = vmatpush.bf16.msra.mxu0 %v883
        %1176 = vmatmul.bf16.gmra.mxu0 %v984
        %v1177 = vpop.f32.mrf.mxu0
        %v1178 = vadd.f32 %v1164, %v1177
        %v1179 = vpop.f32.mrf.mxu0
        %v1180 = vadd.f32 %v1166, %v1179
        %1181 = vdwg.mxu0
        %v1182 = vmax.f32 %v1080, 0.0
        %v1183 = vmax.f32 %v1178, 0.0
        %v1184 = vmax.f32 %v1082, 0.0
        %v1185 = vmax.f32 %v1180, 0.0
        %v1186 = vpack.c.bf16 %v1184, %v1182
        %v1187 = vpack.c.bf16 %v1185, %v1183
        %v1188 = vld [vmem:[#allocation8] sm:$0xff]
        %v1189 = vld [vmem:[#allocation8 + $0x8] sm:$0xff]
        %v1190 = vld [vmem:[#allocation8 + $0x10] sm:$0xff]
        %v1191 = vld [vmem:[#allocation8 + $0x18] sm:$0xff]
        %v1192 = vld [vmem:[#allocation8 + $0x20] sm:$0xff]
        %v1193 = vld [vmem:[#allocation8 + $0x28] sm:$0xff]
        %v1194 = vld [vmem:[#allocation8 + $0x30] sm:$0xff]
        %v1195 = vld [vmem:[#allocation8 + $0x38] sm:$0xff]
        %v1196 = vld [vmem:[#allocation8 + $0x40] sm:$0xff]
        %v1197 = vld [vmem:[#allocation8 + $0x48] sm:$0xff]
        %v1198 = vld [vmem:[#allocation8 + $0x50] sm:$0xff]
        %v1199 = vld [vmem:[#allocation8 + $0x58] sm:$0xff]
        %v1200 = vld [vmem:[#allocation8 + $0x60] sm:$0xff]
        %v1201 = vld [vmem:[#allocation8 + $0x68] sm:$0xff]
        %v1202 = vld [vmem:[#allocation8 + $0x70] sm:$0xff]
        %v1203 = vld [vmem:[#allocation8 + $0x78] sm:$0xff]
        %v1204 = vld [vmem:[#allocation8 + $0x80] sm:$0xff]
        %v1205 = vld [vmem:[#allocation8 + $0x88] sm:$0xff]
        %v1206 = vld [vmem:[#allocation8 + $0x90] sm:$0xff]
        %v1207 = vld [vmem:[#allocation8 + $0x98] sm:$0xff]
        %v1208 = vld [vmem:[#allocation8 + $0xa0] sm:$0xff]
        %v1209 = vld [vmem:[#allocation8 + $0xa8] sm:$0xff]
        %v1210 = vld [vmem:[#allocation8 + $0xb0] sm:$0xff]
        %v1211 = vld [vmem:[#allocation8 + $0xb8] sm:$0xff]
        %v1212 = vld [vmem:[#allocation8 + $0xc0] sm:$0xff]
        %v1213 = vld [vmem:[#allocation8 + $0xc8] sm:$0xff]
        %v1214 = vld [vmem:[#allocation8 + $0xd0] sm:$0xff]
        %v1215 = vld [vmem:[#allocation8 + $0xd8] sm:$0xff]
        %v1216 = vld [vmem:[#allocation8 + $0xe0] sm:$0xff]
        %v1217 = vld [vmem:[#allocation8 + $0xe8] sm:$0xff]
        %v1218 = vld [vmem:[#allocation8 + $0xf0] sm:$0xff]
        %v1219 = vld [vmem:[#allocation8 + $0xf8] sm:$0xff]
        %v1220 = vld [vmem:[%s4] sm:$0x3]
        %v1222 = vperm.slane %v1220, 0
        %v1223 = vperm.slane %v1220, 1
        %v1258 = vunpack.c.l.b16 %v1188
        %v1259 = vunpack.c.h.b16 %v1188
        %v1260 = vunpack.c.l.b16 %v1189
        %v1261 = vunpack.c.h.b16 %v1189
        %v1262 = vunpack.c.l.b16 %v1190
        %v1263 = vunpack.c.h.b16 %v1190
        %v1264 = vunpack.c.l.b16 %v1191
        %v1265 = vunpack.c.h.b16 %v1191
        %v1266 = vunpack.c.l.b16 %v1192
        %v1267 = vunpack.c.h.b16 %v1192
        %v1268 = vunpack.c.l.b16 %v1193
        %v1269 = vunpack.c.h.b16 %v1193
        %v1270 = vunpack.c.l.b16 %v1194
        %v1271 = vunpack.c.h.b16 %v1194
        %v1272 = vunpack.c.l.b16 %v1195
        %v1273 = vunpack.c.h.b16 %v1195
        %v1274 = vunpack.c.l.b16 %v1196
        %v1275 = vunpack.c.h.b16 %v1196
        %v1276 = vunpack.c.l.b16 %v1197
        %v1277 = vunpack.c.h.b16 %v1197
        %v1278 = vunpack.c.l.b16 %v1198
        %v1279 = vunpack.c.h.b16 %v1198
        %v1280 = vunpack.c.l.b16 %v1199
        %v1281 = vunpack.c.h.b16 %v1199
        %v1282 = vunpack.c.l.b16 %v1200
        %v1283 = vunpack.c.h.b16 %v1200
        %v1284 = vunpack.c.l.b16 %v1201
        %v1285 = vunpack.c.h.b16 %v1201
        %v1286 = vunpack.c.l.b16 %v1202
        %v1287 = vunpack.c.h.b16 %v1202
        %v1288 = vunpack.c.l.b16 %v1203
        %v1289 = vunpack.c.h.b16 %v1203
        %v1290 = vunpack.c.l.b16 %v1204
        %v1291 = vunpack.c.h.b16 %v1204
        %v1292 = vunpack.c.l.b16 %v1205
        %v1293 = vunpack.c.h.b16 %v1205
        %v1294 = vunpack.c.l.b16 %v1206
        %v1295 = vunpack.c.h.b16 %v1206
        %v1296 = vunpack.c.l.b16 %v1207
        %v1297 = vunpack.c.h.b16 %v1207
        %v1298 = vunpack.c.l.b16 %v1208
        %v1299 = vunpack.c.h.b16 %v1208
        %v1300 = vunpack.c.l.b16 %v1209
        %v1301 = vunpack.c.h.b16 %v1209
        %v1302 = vunpack.c.l.b16 %v1210
        %v1303 = vunpack.c.h.b16 %v1210
        %v1304 = vunpack.c.l.b16 %v1211
        %v1305 = vunpack.c.h.b16 %v1211
        %v1306 = vunpack.c.l.b16 %v1212
        %v1307 = vunpack.c.h.b16 %v1212
        %v1308 = vunpack.c.l.b16 %v1213
        %v1309 = vunpack.c.h.b16 %v1213
        %v1310 = vunpack.c.l.b16 %v1214
        %v1311 = vunpack.c.h.b16 %v1214
        %v1312 = vunpack.c.l.b16 %v1215
        %v1313 = vunpack.c.h.b16 %v1215
        %v1314 = vunpack.c.l.b16 %v1216
        %v1315 = vunpack.c.h.b16 %v1216
        %v1316 = vunpack.c.l.b16 %v1217
        %v1317 = vunpack.c.h.b16 %v1217
        %v1318 = vunpack.c.l.b16 %v1218
        %v1319 = vunpack.c.h.b16 %v1218
        %v1320 = vunpack.c.l.b16 %v1219
        %v1321 = vunpack.c.h.b16 %v1219
        %v1322 = vpack.c.b16 %v1260, %v1258
        %v1323 = vpack.c.b16 %v1261, %v1259
        %v1324 = vpack.c.b16 %v1264, %v1262
        %v1325 = vpack.c.b16 %v1265, %v1263
        %v1326 = vpack.c.b16 %v1268, %v1266
        %v1327 = vpack.c.b16 %v1269, %v1267
        %v1328 = vpack.c.b16 %v1272, %v1270
        %v1329 = vpack.c.b16 %v1273, %v1271
        %v1330 = vpack.c.b16 %v1276, %v1274
        %v1331 = vpack.c.b16 %v1277, %v1275
        %v1332 = vpack.c.b16 %v1280, %v1278
        %v1333 = vpack.c.b16 %v1281, %v1279
        %v1334 = vpack.c.b16 %v1284, %v1282
        %v1335 = vpack.c.b16 %v1285, %v1283
        %v1336 = vpack.c.b16 %v1288, %v1286
        %v1337 = vpack.c.b16 %v1289, %v1287
        %v1338 = vpack.c.b16 %v1292, %v1290
        %v1339 = vpack.c.b16 %v1293, %v1291
        %v1340 = vpack.c.b16 %v1296, %v1294
        %v1341 = vpack.c.b16 %v1297, %v1295
        %v1342 = vpack.c.b16 %v1300, %v1298
        %v1343 = vpack.c.b16 %v1301, %v1299
        %v1344 = vpack.c.b16 %v1304, %v1302
        %v1345 = vpack.c.b16 %v1305, %v1303
        %v1346 = vpack.c.b16 %v1308, %v1306
        %v1347 = vpack.c.b16 %v1309, %v1307
        %v1348 = vpack.c.b16 %v1312, %v1310
        %v1349 = vpack.c.b16 %v1313, %v1311
        %v1350 = vpack.c.b16 %v1316, %v1314
        %v1351 = vpack.c.b16 %v1317, %v1315
        %v1352 = vpack.c.b16 %v1320, %v1318
        %v1353 = vpack.c.b16 %v1321, %v1319
        %1386 = vmatpush.bf16.msra.mxu0 %v1336
        %1387 = vmatpush.bf16.msra.mxu0 %v1334
        %1388 = vmatpush.bf16.msra.mxu0 %v1332
        %1389 = vmatpush.bf16.msra.mxu0 %v1330
        %1390 = vmatpush.bf16.msra.mxu0 %v1328
        %1391 = vmatpush.bf16.msra.mxu0 %v1326
        %1392 = vmatpush.bf16.msra.mxu0 %v1324
        %1393 = vmatpush.bf16.msra.mxu0 %v1322
        %1394 = vmatmul.bf16.gmra.mxu0 %v1186
        %v1395 = vpop.f32.mrf.mxu0
        %v1396 = vadd.f32 %v1222, %v1395
        %v1397 = vpop.f32.mrf.mxu0
        %v1398 = vadd.f32 %v1222, %v1397
        %1399 = vdwg.mxu0
        %1400 = vmatpush.bf16.msra.mxu0 %v1352
        %1401 = vmatpush.bf16.msra.mxu0 %v1350
        %1402 = vmatpush.bf16.msra.mxu0 %v1348
        %1403 = vmatpush.bf16.msra.mxu0 %v1346
        %1404 = vmatpush.bf16.msra.mxu0 %v1344
        %1405 = vmatpush.bf16.msra.mxu0 %v1342
        %1406 = vmatpush.bf16.msra.mxu0 %v1340
        %1407 = vmatpush.bf16.msra.mxu0 %v1338
        %1408 = vmatmul.bf16.gmra.mxu0 %v1187
        %v1409 = vpop.f32.mrf.mxu0
        %v1410 = vadd.f32 %v1396, %v1409
        %v1411 = vpop.f32.mrf.mxu0
        %v1412 = vadd.f32 %v1398, %v1411
        %1413 = vdwg.mxu0
        %1414 = vmatpush.bf16.msra.mxu0 %v1337
        %1415 = vmatpush.bf16.msra.mxu0 %v1335
        %1416 = vmatpush.bf16.msra.mxu0 %v1333
        %1417 = vmatpush.bf16.msra.mxu0 %v1331
        %1418 = vmatpush.bf16.msra.mxu0 %v1329
        %1419 = vmatpush.bf16.msra.mxu0 %v1327
        %1420 = vmatpush.bf16.msra.mxu0 %v1325
        %1421 = vmatpush.bf16.msra.mxu0 %v1323
        %1422 = vmatmul.bf16.gmra.mxu0 %v1186
        %v1423 = vpop.f32.mrf.mxu0
        %v1424 = vadd.f32 %v1223, %v1423
        %v1425 = vpop.f32.mrf.mxu0
        %v1426 = vadd.f32 %v1223, %v1425
        %1427 = vdwg.mxu0
        %1428 = vmatpush.bf16.msra.mxu0 %v1353
        %1429 = vmatpush.bf16.msra.mxu0 %v1351
        %1430 = vmatpush.bf16.msra.mxu0 %v1349
        %1431 = vmatpush.bf16.msra.mxu0 %v1347
        %1432 = vmatpush.bf16.msra.mxu0 %v1345
        %1433 = vmatpush.bf16.msra.mxu0 %v1343
        %1434 = vmatpush.bf16.msra.mxu0 %v1341
        %1435 = vmatpush.bf16.msra.mxu0 %v1339
        %1436 = vmatmul.bf16.gmra.mxu0 %v1187
        %v1437 = vpop.f32.mrf.mxu0
        %v1438 = vadd.f32 %v1424, %v1437
        %v1439 = vpop.f32.mrf.mxu0
        %v1440 = vadd.f32 %v1426, %v1439
        %1441 = vdwg.mxu0
        %v1442 = vmax.f32 %v1410, 0.0
        %v1443 = vmax.f32 %v1438, 0.0
        %v1444 = vmax.f32 %v1412, 0.0
        %v1445 = vmax.f32 %v1440, 0.0
        %v1446 = vpack.c.bf16 %v1444, %v1442
        %v1447 = vpack.c.bf16 %v1445, %v1443
        %v1448 = vld [vmem:[#allocation10] sm:$0xf]
        %v1449 = vld [vmem:[#allocation10 + $0x4] sm:$0xf]
        %v1450 = vld [vmem:[#allocation10 + $0x8] sm:$0xf]
        %v1451 = vld [vmem:[#allocation10 + $0xc] sm:$0xf]
        %v1452 = vld [vmem:[#allocation10 + $0x10] sm:$0xf]
        %v1453 = vld [vmem:[#allocation10 + $0x14] sm:$0xf]
        %v1454 = vld [vmem:[#allocation10 + $0x18] sm:$0xf]
        %v1455 = vld [vmem:[#allocation10 + $0x1c] sm:$0xf]
        %v1456 = vld [vmem:[#allocation10 + $0x20] sm:$0xf]
        %v1457 = vld [vmem:[#allocation10 + $0x24] sm:$0xf]
        %v1458 = vld [vmem:[#allocation10 + $0x28] sm:$0xf]
        %v1459 = vld [vmem:[#allocation10 + $0x2c] sm:$0xf]
        %v1460 = vld [vmem:[#allocation10 + $0x30] sm:$0xf]
        %v1461 = vld [vmem:[#allocation10 + $0x34] sm:$0xf]
        %v1462 = vld [vmem:[#allocation10 + $0x38] sm:$0xf]
        %v1463 = vld [vmem:[#allocation10 + $0x3c] sm:$0xf]
        %v1464 = vld [vmem:[#allocation10 + $0x40] sm:$0xf]
        %v1465 = vld [vmem:[#allocation10 + $0x44] sm:$0xf]
        %v1466 = vld [vmem:[#allocation10 + $0x48] sm:$0xf]
        %v1467 = vld [vmem:[#allocation10 + $0x4c] sm:$0xf]
        %v1468 = vld [vmem:[#allocation10 + $0x50] sm:$0xf]
        %v1469 = vld [vmem:[#allocation10 + $0x54] sm:$0xf]
        %v1470 = vld [vmem:[#allocation10 + $0x58] sm:$0xf]
        %v1471 = vld [vmem:[#allocation10 + $0x5c] sm:$0xf]
        %v1472 = vld [vmem:[#allocation10 + $0x60] sm:$0xf]
        %v1473 = vld [vmem:[#allocation10 + $0x64] sm:$0xf]
        %v1474 = vld [vmem:[#allocation10 + $0x68] sm:$0xf]
        %v1475 = vld [vmem:[#allocation10 + $0x6c] sm:$0xf]
        %v1476 = vld [vmem:[#allocation10 + $0x70] sm:$0xf]
        %v1477 = vld [vmem:[#allocation10 + $0x74] sm:$0xf]
        %v1478 = vld [vmem:[#allocation10 + $0x78] sm:$0xf]
        %v1479 = vld [vmem:[#allocation10 + $0x7c] sm:$0xf]
        %v1480 = vld [vmem:[%s6] sm:$0x1]
        %v1482 = vperm.slane %v1480, 0
        %v1516 = vunpack.c.l.b16 %v1448
        %v1517 = vunpack.c.l.b16 %v1449
        %v1518 = vunpack.c.l.b16 %v1450
        %v1519 = vunpack.c.l.b16 %v1451
        %v1520 = vunpack.c.l.b16 %v1452
        %v1521 = vunpack.c.l.b16 %v1453
        %v1522 = vunpack.c.l.b16 %v1454
        %v1523 = vunpack.c.l.b16 %v1455
        %v1524 = vunpack.c.l.b16 %v1456
        %v1525 = vunpack.c.l.b16 %v1457
        %v1526 = vunpack.c.l.b16 %v1458
        %v1527 = vunpack.c.l.b16 %v1459
        %v1528 = vunpack.c.l.b16 %v1460
        %v1529 = vunpack.c.l.b16 %v1461
        %v1530 = vunpack.c.l.b16 %v1462
        %v1531 = vunpack.c.l.b16 %v1463
        %v1532 = vunpack.c.l.b16 %v1464
        %v1533 = vunpack.c.l.b16 %v1465
        %v1534 = vunpack.c.l.b16 %v1466
        %v1535 = vunpack.c.l.b16 %v1467
        %v1536 = vunpack.c.l.b16 %v1468
        %v1537 = vunpack.c.l.b16 %v1469
        %v1538 = vunpack.c.l.b16 %v1470
        %v1539 = vunpack.c.l.b16 %v1471
        %v1540 = vunpack.c.l.b16 %v1472
        %v1541 = vunpack.c.l.b16 %v1473
        %v1542 = vunpack.c.l.b16 %v1474
        %v1543 = vunpack.c.l.b16 %v1475
        %v1544 = vunpack.c.l.b16 %v1476
        %v1545 = vunpack.c.l.b16 %v1477
        %v1546 = vunpack.c.l.b16 %v1478
        %v1547 = vunpack.c.l.b16 %v1479
        %v1548 = vpack.c.b16 %v1517, %v1516
        %v1549 = vpack.c.b16 %v1519, %v1518
        %v1550 = vpack.c.b16 %v1521, %v1520
        %v1551 = vpack.c.b16 %v1523, %v1522
        %v1552 = vpack.c.b16 %v1525, %v1524
        %v1553 = vpack.c.b16 %v1527, %v1526
        %v1554 = vpack.c.b16 %v1529, %v1528
        %v1555 = vpack.c.b16 %v1531, %v1530
        %v1556 = vpack.c.b16 %v1533, %v1532
        %v1557 = vpack.c.b16 %v1535, %v1534
        %v1558 = vpack.c.b16 %v1537, %v1536
        %v1559 = vpack.c.b16 %v1539, %v1538
        %v1560 = vpack.c.b16 %v1541, %v1540
        %v1561 = vpack.c.b16 %v1543, %v1542
        %v1562 = vpack.c.b16 %v1545, %v1544
        %v1563 = vpack.c.b16 %v1547, %v1546
        %1580 = vmatpush.bf16.msra.mxu0 %v1555
        %1581 = vmatpush.bf16.msra.mxu0 %v1554
        %1582 = vmatpush.bf16.msra.mxu0 %v1553
        %1583 = vmatpush.bf16.msra.mxu0 %v1552
        %1584 = vmatpush.bf16.msra.mxu0 %v1551
        %1585 = vmatpush.bf16.msra.mxu0 %v1550
        %1586 = vmatpush.bf16.msra.mxu0 %v1549
        %1587 = vmatpush.bf16.msra.mxu0 %v1548
        %1588 = vmatmul.bf16.gmra.mxu0 %v1446
        %v1589 = vpop.f32.mrf.mxu0
        %v1590 = vadd.f32 %v1482, %v1589
        %v1591 = vpop.f32.mrf.mxu0
        %v1592 = vadd.f32 %v1482, %v1591
        %1593 = vdwg.mxu0
        %1594 = vmatpush.bf16.msra.mxu0 %v1563
        %1595 = vmatpush.bf16.msra.mxu0 %v1562
        %1596 = vmatpush.bf16.msra.mxu0 %v1561
        %1597 = vmatpush.bf16.msra.mxu0 %v1560
        %1598 = vmatpush.bf16.msra.mxu0 %v1559
        %1599 = vmatpush.bf16.msra.mxu0 %v1558
        %1600 = vmatpush.bf16.msra.mxu0 %v1557
        %1601 = vmatpush.bf16.msra.mxu0 %v1556
        %1602 = vmatmul.bf16.gmra.mxu0 %v1447
        %v1603 = vpop.f32.mrf.mxu0
        %v1604 = vadd.f32 %v1590, %v1603
        %v1605 = vpop.f32.mrf.mxu0
        %v1606 = vadd.f32 %v1592, %v1605
        %1607 = vdwg.mxu0
        %v1608 = vpack.c.bf16 %v1604, %v1604
        %v1609 = vpack.c.bf16 %v1606, %v1606
        %1610 = vst [vmem:[%s363] sm:$0xf] %v1608
        %1611 = vst [vmem:[%s363 + $0x4] sm:$0xf] %v1609
        %s1612 = sand.u32 %s186, 1
        %s1613 = scalar_lea.sflag [#allocation4], %s1612
        %s1614 = sand.u32 %s186, 1
        %s1615 = smul.addr %s1614, 8
        %s1616 = scalar_lea.vmem [#allocation11], %s1615
        // Predicated region
        $region69: #{tpu_custom_call.1} parent=47 // pred_check
          %p1617 = pneg %p196
        $region70: #{tpu_custom_call.1} parent=47 // pred_check_branch
          %1619 = sbr.rel (%p1617) target = $region72
        $region71: #{tpu_custom_call.1} parent=47 // pred_region
          %s1620 = smul.u32 2, %s26
          %1622 = vsyncadd %s1613, 0
          %s1623 = smul.addr %s1620, 4
          %s1624 = scalar_lea.hbm %s7, %s1623
          %s1625 = sshll.u32 %s1616, 4
          %s1626 = int_to_ptr.vmem [resolvable:$true] %s1625
          %s1627 = sshll.u32 %s1624, 4
          %s1628 = int_to_ptr.hbm [resolvable:$true] %s1627
          %1633 = dma.vmem_to_hbm [thread:$0]  %s1626, 128, %s1628, %s1613, 64, 64, 4
        $region72: #{tpu_custom_call.1} parent=47 // pred_fallthru
          _
      $region48: #{tpu_custom_call.1} parent=5 // pred_fallthru
        _
      %p1634 = scmp.le.s32.totalorder 2, %s21
      // Predicated region
      $region73: #{tpu_custom_call.1} parent=5 // pred_check
        %p1635 = pneg %p1634
      $region74: #{tpu_custom_call.1} parent=5 // pred_check_branch
        %1637 = sbr.rel (%p1635) target = $region76
      $region75: #{tpu_custom_call.1} parent=5 // pred_region
        %s1638 = ssub.s32 %s21, 2
        // Predicated region
        $region77: #{tpu_custom_call.1} parent=75 // pred_check
          %p1639 = pneg %p202
        $region78: #{tpu_custom_call.1} parent=75 // pred_check_branch
          %1641 = sbr.rel (%p1639) target = $region80
        $region79: #{tpu_custom_call.1} parent=75 // pred_region
          %s1642 = sand.u32 %s187, 1
          %s1643 = scalar_lea.sflag [#allocation4], %s1642
          %s1644 = sand.u32 %s187, 1
          %s1645 = smul.addr %s1644, 8
          %s1646 = scalar_lea.vmem [#allocation11], %s1645
          %1648 = dma.done %s1643, 128
        $region80: #{tpu_custom_call.1} parent=75 // pred_fallthru
          _
      $region76: #{tpu_custom_call.1} parent=5 // pred_fallthru
        _
    $region6: #{tpu_custom_call.1} parent=1 // loop_footer
      %s25 = sadd.s32 1, %s21
    $region7: #{tpu_custom_call.1} parent=1 // loop_footer_branch
      %20 = sbr.rel target = $region3
    $region8: #{tpu_custom_call.1} parent=1 // loop_exit
      _
    %1649 = vsyncpa [#allocation3], 1
    %s1650 = scalar_lea.sflag [#allocation3], 1
    %1651 = vsyncpa %s1650, 1
    %1652 = vsyncpa [#allocation6], 1
    %1653 = vsyncpa [#allocation9], 1
    %1654 = vsyncpa [#allocation4], 1
    %s1655 = scalar_lea.sflag [#allocation4], 1
    %1656 = vsyncpa %s1655, 1

</llo_original>
